<compile_context>
chip_gen: v7x
topology: tpu7x:2x2x1
jax: 0.10.0
libtpu: 0.0.40
codegen_flags: <defaults>
</compile_context>

<pallas_src>
import functools
import math

import jax
import jax.numpy as jnp
from jax.experimental import pallas as pl
from jax.experimental.pallas import tpu as pltpu


def _round_up(x, m):
    return ((x + m - 1) // m) * m


# ---------------------------------------------------------------------------
# Kernel
# ---------------------------------------------------------------------------
def _fused_rnn_kernel(*refs, tc, num_layers, t_real, mm_dtype, unroll, has_wxhr):
    """Fused multi-layer tanh RNN on one (batch-chunk, time-chunk) tile.

    refs (in order):
      x_ref   : (Tc, Bc, Dp)  f32      layer-0 input slab
      wxh0_ref: (Dp, Hp)      mm_dtype layer-0 W_ih^T (zero padded)
      wxhr_ref: (L-1, Hp, Hp) mm_dtype W_ih^T for layers 1..L-1 (only if L > 1)
      whh_ref : (L, Hp, Hp)   mm_dtype W_hh^T per layer (zero padded)
      b_ref   : (L, 1, Hp)    f32      b_ih + b_hh per layer (zero padded)
      out_ref : (Tc, Bc, Hp)  f32      last-layer output slab; also reused as the
                                       in-VMEM inter-layer activation slab
      hn_ref  : (L, Bc, Hp)   f32      final hidden state per layer
      h_scr   : (L, Bc, Hp)   f32      hidden state carried across time chunks
    """
    if has_wxhr:
        x_ref, wxh0_ref, wxhr_ref, whh_ref, b_ref, out_ref, hn_ref, h_scr = refs
    else:
        x_ref, wxh0_ref, whh_ref, b_ref, out_ref, hn_ref, h_scr = refs
        wxhr_ref = None

    t_chunk = pl.program_id(1)

    @pl.when(t_chunk == 0)
    def _init():
        h_scr[...] = jnp.zeros_like(h_scr)

    _, bc, dp = x_ref.shape
    hp = whh_ref.shape[-1]

    last_chunk = (t_real - 1) // tc   # static: chunk holding the last real step
    last_in = (t_real - 1) % tc       # static: its index inside that chunk

    for layer in range(num_layers):
        # ---- chunk-wide input projection: one big MXU matmul, hoisted off the
        # serial path.  Operands cast to mm_dtype (bf16) only at the dot;
        # accumulation stays f32.
        if layer == 0:
            inp = x_ref[...].astype(mm_dtype).reshape(tc * bc, dp)
            wxh = wxh0_ref[...]
        else:
            inp = out_ref[...].astype(mm_dtype).reshape(tc * bc, hp)
            wxh = wxhr_ref[layer - 1]
        gates = jnp.dot(inp, wxh, preferred_element_type=jnp.float32) + b_ref[layer]
        out_ref[...] = gates.reshape(tc, bc, hp)

        # ---- serial recurrence over the chunk (critical path): bf16 MXU
        # operands, f32 accumulate + f32 tanh (EUP).
        whh = whh_ref[layer]

        def step(t, h, whh=whh):
            h_new = jnp.tanh(
                out_ref[t]
                + jnp.dot(h.astype(mm_dtype), whh,
                          preferred_element_type=jnp.float32))
            out_ref[t] = h_new
            return h_new

        h_fin = jax.lax.fori_loop(0, tc, step, h_scr[layer], unroll=unroll)
        h_scr[layer] = h_fin

        # out_ref already holds h_t for every t and last_in is static, so the
        # final-state snapshot is a single row copy (no per-step select).
        @pl.when(t_chunk == last_chunk)
        def _snap(layer=layer):
            hn_ref[layer] = out_ref[last_in]


# ---------------------------------------------------------------------------
# Tiling / VMEM budgeting
# ---------------------------------------------------------------------------
_VMEM_TILE_BUDGET = 44 << 20   # target working set: fits v7x's 64 MiB w/ headroom


def _vmem_estimate(tc, bc, dp, hp, num_layers, w_bytes):
    """Rough VMEM working-set estimate (bytes) for one grid step."""
    weights = (dp * hp + max(num_layers - 1, 0) * hp * hp
               + num_layers * hp * hp) * w_bytes + num_layers * hp * 4
    weights *= 2                              # conservative: assume double-buffered
    blocks = 2 * tc * bc * dp * 4             # x block (f32), double-buffered
    blocks += 2 * tc * bc * hp * 4            # out block (f32), double-buffered
    blocks += 2 * num_layers * bc * hp * 4    # hn block, double-buffered
    scratch = num_layers * bc * hp * 4        # h_scr
    temps = 2 * tc * bc * hp * 4              # gates temporary + bf16 copies
    return weights + blocks + scratch + temps


def _select_tiles(b8, t_len, dp, hp, num_layers, w_bytes):
    """Pick (Bc, Tc): biggest batch chunk that fits, then the longest time chunk.

    Small batch -> long time chunks (recurrence-latency-bound; amortize the
    per-grid-step overhead, grow the hoisted projection matmul).
    Large batch -> Bc up to 256 (fills the 256-row MXU on v6e/v7x).
    """
    for bc in (256, 128, 64, 32, 16, 8):
        if bc > b8:
            continue
        tc_cap = 128 if bc <= 32 else 32
        n_chunks = pl.cdiv(t_len, min(t_len, tc_cap))
        tc = pl.cdiv(t_len, n_chunks)
        while tc > 8 and _vmem_estimate(tc, bc, dp, hp, num_layers,
                                        w_bytes) > _VMEM_TILE_BUDGET:
            n_chunks += 1
            tc = pl.cdiv(t_len, n_chunks)
        if _vmem_estimate(tc, bc, dp, hp, num_layers, w_bytes) <= _VMEM_TILE_BUDGET:
            return bc, tc
    return 8, min(t_len, 8)


def _invariant_spec(block_shape, index_map):
    """BlockSpec for a grid-invariant operand (constant index_map).

    Single-buffer it (pipeline_mode=pl.Buffered(1)) when this JAX exposes the
    knob: it is never re-fetched, so double-buffering would only double its
    VMEM footprint."""
    if hasattr(pl, "Buffered"):
        try:
            return pl.BlockSpec(block_shape, index_map, pipeline_mode=pl.Buffered(1))
        except TypeError:
            pass
    return pl.BlockSpec(block_shape, index_map)


# ---------------------------------------------------------------------------
# Wrapper
# ---------------------------------------------------------------------------
def custom_rnn_forward(x_btd, params, *, matmul_dtype=jnp.bfloat16):
    """Mirrors CustomRNN.forward (batch_first=True).

    x_btd : (B, T, input_size)
    params: list of per-layer dicts with 'w_ih', 'b_ih', 'w_hh', 'b_hh'.
    matmul_dtype: MXU operand dtype (bf16 fast path; f32 for exact checks).
    Returns (outputs (B, T, H), h_n (num_layers, B, H)).
    """
    x_btd = jnp.asarray(x_btd, jnp.float32)
    B, T, D = x_btd.shape
    L = len(params)
    H = params[0]["w_hh"].shape[0]

    # Hardware-tile padding: lanes (last dim) -> multiples of 128, sublanes -> 8.
    Dp = _round_up(D, 128)
    Hp = _round_up(H, 128)
    B8 = _round_up(B, 8)
    w_bytes = jnp.dtype(matmul_dtype).itemsize
    Bc, Tc = _select_tiles(B8, T, Dp, Hp, L, w_bytes)
    Bp = _round_up(B8, Bc)
    Tp = _round_up(T, Tc)

    # Fully unroll the recurrence only when live state is small; otherwise cap
    # the unroll to stay inside the 64-vreg budget (no spill stores on the
    # serial critical path).
    unroll = True if (Bc < 128 and Tc <= 32) else 8

    # Time-major, zero-padded input (padding is exact zeros so padded lanes
    # never couple back into real lanes; sliced off below).
    x_tbd = jnp.transpose(x_btd, (1, 0, 2))
    x_pad = jnp.zeros((Tp, Bp, Dp), jnp.float32).at[:T, :B, :D].set(x_tbd)

    def pad2(w, r, c):
        return jnp.zeros((r, c), jnp.float32).at[:w.shape[0], :w.shape[1]].set(w)

    # Pre-transposed, zero-padded weights, cast to the MXU operand dtype.
    wxh0 = pad2(jnp.transpose(params[0]["w_ih"]).astype(jnp.float32), Dp, Hp
                ).astype(matmul_dtype)
    whh = jnp.stack([pad2(jnp.transpose(p["w_hh"]).astype(jnp.float32), Hp, Hp)
                     for p in params]).astype(matmul_dtype)
    bias = jnp.stack([
        jnp.zeros((Hp,), jnp.float32).at[:H].set(
            (p["b_ih"] + p["b_hh"]).astype(jnp.float32))
        for p in params]).reshape(L, 1, Hp)

    in_specs = [
        pl.BlockSpec((Tc, Bc, Dp), lambda b, t: (t, b, 0)),
        _invariant_spec((Dp, Hp), lambda b, t: (0, 0)),
    ]
    operands = [x_pad, wxh0]
    if L > 1:
        wxhr = jnp.stack([pad2(jnp.transpose(p["w_ih"]).astype(jnp.float32), Hp, Hp)
                          for p in params[1:]]).astype(matmul_dtype)
        in_specs.append(_invariant_spec((L - 1, Hp, Hp), lambda b, t: (0, 0, 0)))
        operands.append(wxhr)
    in_specs += [
        _invariant_spec((L, Hp, Hp), lambda b, t: (0, 0, 0)),
        _invariant_spec((L, 1, Hp), lambda b, t: (0, 0, 0)),
    ]
    operands += [whh, bias]

    kernel = functools.partial(
        _fused_rnn_kernel, tc=Tc, num_layers=L, t_real=T,
        mm_dtype=matmul_dtype, unroll=unroll, has_wxhr=(L > 1))

    vmem_est = _vmem_estimate(Tc, Bc, Dp, Hp, L, w_bytes)
    vmem_limit = int(min(max(52 << 20, int(vmem_est * 1.25)), 112 << 20))

    out_pad, hn_pad = pl.pallas_call(
        kernel,
        out_shape=(
            jax.ShapeDtypeStruct((Tp, Bp, Hp), jnp.float32),
            jax.ShapeDtypeStruct((L, Bp, Hp), jnp.float32),
        ),
        grid_spec=pltpu.PrefetchScalarGridSpec(
            num_scalar_prefetch=0,
            grid=(Bp // Bc, Tp // Tc),
            in_specs=in_specs,
            out_specs=[
                pl.BlockSpec((Tc, Bc, Hp), lambda b, t: (t, b, 0)),
                pl.BlockSpec((L, Bc, Hp), lambda b, t: (0, b, 0)),
            ],
            scratch_shapes=[pltpu.VMEM((L, Bc, Hp), jnp.float32)],
        ),
        compiler_params=pltpu.CompilerParams(
            dimension_semantics=("parallel", "arbitrary"),
            vmem_limit_bytes=vmem_limit,
        ),
    )(*operands)

    outputs = jnp.transpose(out_pad[:T, :B, :H], (1, 0, 2))   # (B, T, H)
    h_n = hn_pad[:, :B, :H]                                    # (L, B, H)
    return outputs, h_n


# ---------------------------------------------------------------------------
# Parameter init + pure-JAX reference (verification only)
# ---------------------------------------------------------------------------
def init_params(key, input_size, hidden_size, num_layers):
    """Matches reset_parameters: kaiming_uniform_(a=sqrt(5)) weights
    (bound = 1/sqrt(fan_in)), zero biases."""
    params = []
    for layer in range(num_layers):
        in_dim = input_size if layer == 0 else hidden_size
        key, k1, k2 = jax.random.split(key, 3)
        bound_ih = math.sqrt(1.0 / in_dim)
        bound_hh = math.sqrt(1.0 / hidden_size)
        params.append({
            "w_ih": jax.random.uniform(k1, (hidden_size, in_dim),
                                       jnp.float32, -bound_ih, bound_ih),
            "b_ih": jnp.zeros((hidden_size,), jnp.float32),
            "w_hh": jax.random.uniform(k2, (hidden_size, hidden_size),
                                       jnp.float32, -bound_hh, bound_hh),
            "b_hh": jnp.zeros((hidden_size,), jnp.float32),
        })
    return params


def reference_forward(x_btd, params):
    """Pure-JAX replica of the PyTorch loop."""
    B, T, _ = x_btd.shape
    H = params[0]["w_ih"].shape[0]
    h_finals = []
    layer_in = x_btd
    for p in params:
        b_h = p["b_ih"] + p["b_hh"]
        h = jnp.zeros((B, H), jnp.float32)
        outs = []
        for t in range(T):
            x_t = layer_in[:, t, :]
            h = jnp.tanh(x_t @ p["w_ih"].T + h @ p["w_hh"].T + b_h)
            outs.append(h[:, None, :])
        layer_in = jnp.concatenate(outs, axis=1)
        h_finals.append(h)
    return layer_in, jnp.stack(h_finals, axis=0)


if __name__ == "__main__":
    input_size, hidden_size, num_layers = 32, 32, 2
    batch, seq = 2, 8

    key = jax.random.PRNGKey(0)
    key, kx = jax.random.split(key)
    x = jax.random.normal(kx, (batch, seq, input_size), jnp.float32)
    params = init_params(key, input_size, hidden_size, num_layers)

    ref_out, ref_h_n = reference_forward(x, params)

    # Exact path (f32 MXU operands) -- tight tolerance.
    out32, hn32 = custom_rnn_forward(x, params, matmul_dtype=jnp.float32)
    out32 = jax.block_until_ready(out32)
    hn32 = jax.block_until_ready(hn32)
    assert out32.shape == (batch, seq, hidden_size)
    assert hn32.shape == (num_layers, batch, hidden_size)
    assert jnp.allclose(out32, ref_out, atol=2e-5, rtol=2e-5), \
        float(jnp.max(jnp.abs(out32 - ref_out)))
    assert jnp.allclose(hn32, ref_h_n, atol=2e-5, rtol=2e-5), \
        float(jnp.max(jnp.abs(hn32 - ref_h_n)))

    # Fast path (bf16 MXU operands, f32 accumulation/elementwise) -- loose tolerance.
    out, h_n = custom_rnn_forward(x, params)
    out = jax.block_until_ready(out)
    h_n = jax.block_until_ready(h_n)
    assert out.shape == (batch, seq, hidden_size)
    assert h_n.shape == (num_layers, batch, hidden_size)
    assert jnp.allclose(out, ref_out, atol=3e-2, rtol=3e-2), \
        float(jnp.max(jnp.abs(out - ref_out)))
    assert jnp.allclose(h_n, ref_h_n, atol=3e-2, rtol=3e-2), \
        float(jnp.max(jnp.abs(h_n - ref_h_n)))

    print("KERNEL_OK")
</pallas_src>

<mosaic_0001>
module attributes {stable_mosaic.version = 11 : i64} {
  func.func @_fused_rnn_kernel(%arg0: i32, %arg1: i32, %arg2: memref<8x8x128xf32, #tpu.memory_space<vmem>>, %arg3: memref<128x128xf32, #tpu.memory_space<vmem>>, %arg4: memref<1x128x128xf32, #tpu.memory_space<vmem>>, %arg5: memref<2x128x128xf32, #tpu.memory_space<vmem>>, %arg6: memref<2x1x128xf32, #tpu.memory_space<vmem>>, %arg7: memref<8x8x128xf32, #tpu.memory_space<vmem>>, %arg8: memref<2x8x128xf32, #tpu.memory_space<vmem>>, %arg9: memref<2x8x128xf32, #tpu.memory_space<vmem>>) attributes {dimension_semantics = [#tpu.dimension_semantics<parallel>, #tpu.dimension_semantics<arbitrary>], iteration_bounds = array<i64: 1, 1>, scalar_prefetch = 0 : i64, scratch_operands = 1 : i64, tpu.core_type = #tpu.core_type<tc>, window_params = [{transform_indices = @transform_0, window_bounds = array<i64: 8, 8, 128>}, {pipeline_mode = #tpu.pipeline_mode<synchronous>, transform_indices = @transform_1, window_bounds = array<i64: 128, 128>}, {pipeline_mode = #tpu.pipeline_mode<synchronous>, transform_indices = @transform_2, window_bounds = array<i64: 1, 128, 128>}, {pipeline_mode = #tpu.pipeline_mode<synchronous>, transform_indices = @transform_3, window_bounds = array<i64: 2, 128, 128>}, {pipeline_mode = #tpu.pipeline_mode<synchronous>, transform_indices = @transform_4, window_bounds = array<i64: 2, 1, 128>}, {transform_indices = @transform_5, window_bounds = array<i64: 8, 8, 128>}, {transform_indices = @transform_6, window_bounds = array<i64: 2, 8, 128>}]} {
    %c0_i32 = arith.constant 0 : i32
    %0 = arith.cmpi eq, %arg1, %c0_i32 : i32
    %1 = arith.extui %0 : i1 to i32
    %c0_i32_0 = arith.constant 0 : i32
    %2 = arith.cmpi ne, %1, %c0_i32_0 : i32
    scf.if %2 {
      %cst_135 = arith.constant 0.000000e+00 : f32
      %204 = vector.broadcast %cst_135 : f32 to vector<2x8x128xf32>
      %c0_136 = arith.constant 0 : index
      %c0_137 = arith.constant 0 : index
      %c0_138 = arith.constant 0 : index
      %205 = vector.load %arg9[%c0_136, %c0_137, %c0_138] : memref<2x8x128xf32, #tpu.memory_space<vmem>>, vector<2x8x128xf32>
      tpu.vector_store %arg9[%c0_136, %c0_137, %c0_138], %204 {strides = array<i32>} : memref<2x8x128xf32, #tpu.memory_space<vmem>>, vector<2x8x128xf32>,
    } else {
    }
    %c0 = arith.constant 0 : index
    %c0_1 = arith.constant 0 : index
    %c0_2 = arith.constant 0 : index
    %3 = vector.load %arg2[%c0, %c0_1, %c0_2] : memref<8x8x128xf32, #tpu.memory_space<vmem>>, vector<8x8x128xf32>
    %4 = vector.shape_cast %3 : vector<8x8x128xf32> to vector<64x128xf32>
    %c0_3 = arith.constant 0 : index
    %c0_4 = arith.constant 0 : index
    %5 = vector.load %arg3[%c0_3, %c0_4] : memref<128x128xf32, #tpu.memory_space<vmem>>, vector<128x128xf32>
    %cst = arith.constant dense<0.000000e+00> : vector<64x128xf32>
    %6 = tpu.matmul %4, %5, %cst {dimension_numbers = #tpu.dot_dimension_numbers<[1], [0], [0], [1], [0, 0, 1, 1], [], []>} : vector<64x128xf32>, vector<128x128xf32>, vector<64x128xf32> -> vector<64x128xf32>
    %c0_5 = arith.constant 0 : index
    %c0_6 = arith.constant 0 : index
    %c0_7 = arith.constant 0 : index
    %7 = vector.load %arg6[%c0_5, %c0_6, %c0_7] : memref<2x1x128xf32, #tpu.memory_space<vmem>>, vector<1x1x128xf32>
    %8 = vector.shape_cast %7 : vector<1x1x128xf32> to vector<1x128xf32>
    %9 = vector.broadcast %8 : vector<1x128xf32> to vector<64x128xf32>
    %10 = arith.addf %6, %9 : vector<64x128xf32>
    %11 = vector.shape_cast %10 : vector<64x128xf32> to vector<8x8x128xf32>
    %c0_8 = arith.constant 0 : index
    %c0_9 = arith.constant 0 : index
    %c0_10 = arith.constant 0 : index
    %12 = vector.load %arg7[%c0_8, %c0_9, %c0_10] : memref<8x8x128xf32, #tpu.memory_space<vmem>>, vector<8x8x128xf32>
    tpu.vector_store %arg7[%c0_8, %c0_9, %c0_10], %11 {strides = array<i32>} : memref<8x8x128xf32, #tpu.memory_space<vmem>>, vector<8x8x128xf32>,
    %c0_11 = arith.constant 0 : index
    %c0_12 = arith.constant 0 : index
    %c0_13 = arith.constant 0 : index
    %13 = vector.load %arg5[%c0_11, %c0_12, %c0_13] : memref<2x128x128xf32, #tpu.memory_space<vmem>>, vector<1x128x128xf32>
    %14 = vector.shape_cast %13 : vector<1x128x128xf32> to vector<128x128xf32>
    %c0_14 = arith.constant 0 : index
    %c0_15 = arith.constant 0 : index
    %c0_16 = arith.constant 0 : index
    %15 = vector.load %arg9[%c0_14, %c0_15, %c0_16] : memref<2x8x128xf32, #tpu.memory_space<vmem>>, vector<1x8x128xf32>
    %16 = vector.shape_cast %15 : vector<1x8x128xf32> to vector<8x128xf32>
    %c0_i32_17 = arith.constant 0 : i32
    %17 = arith.index_cast %c0_i32_17 : i32 to index
    %c0_18 = arith.constant 0 : index
    %c0_19 = arith.constant 0 : index
    %18 = vector.load %arg7[%17, %c0_18, %c0_19] : memref<8x8x128xf32, #tpu.memory_space<vmem>>, vector<1x8x128xf32>
    %19 = vector.shape_cast %18 : vector<1x8x128xf32> to vector<8x128xf32>
    %cst_20 = arith.constant dense<0.000000e+00> : vector<8x128xf32>
    %20 = tpu.matmul %16, %14, %cst_20 {dimension_numbers = #tpu.dot_dimension_numbers<[1], [0], [0], [1], [0, 0, 1, 1], [], []>} : vector<8x128xf32>, vector<128x128xf32>, vector<8x128xf32> -> vector<8x128xf32>
    %21 = arith.addf %19, %20 : vector<8x128xf32>
    %22 = math.tanh %21 : vector<8x128xf32>
    %23 = arith.index_cast %c0_i32_17 : i32 to index
    %c0_21 = arith.constant 0 : index
    %c0_22 = arith.constant 0 : index
    %24 = vector.load %arg7[%23, %c0_21, %c0_22] : memref<8x8x128xf32, #tpu.memory_space<vmem>>, vector<1x8x128xf32>
    %25 = vector.shape_cast %24 : vector<1x8x128xf32> to vector<8x128xf32>
    %26 = vector.shape_cast %22 : vector<8x128xf32> to vector<1x8x128xf32>
    tpu.vector_store %arg7[%23, %c0_21, %c0_22], %26 {strides = array<i32>} : memref<8x8x128xf32, #tpu.memory_space<vmem>>, vector<1x8x128xf32>,
    %c1_i32 = arith.constant 1 : i32
    %27 = arith.index_cast %c1_i32 : i32 to index
    %c0_23 = arith.constant 0 : index
    %c0_24 = arith.constant 0 : index
    %28 = vector.load %arg7[%27, %c0_23, %c0_24] : memref<8x8x128xf32, #tpu.memory_space<vmem>>, vector<1x8x128xf32>
    %29 = vector.shape_cast %28 : vector<1x8x128xf32> to vector<8x128xf32>
    %cst_25 = arith.constant dense<0.000000e+00> : vector<8x128xf32>
    %30 = tpu.matmul %22, %14, %cst_25 {dimension_numbers = #tpu.dot_dimension_numbers<[1], [0], [0], [1], [0, 0, 1, 1], [], []>} : vector<8x128xf32>, vector<128x128xf32>, vector<8x128xf32> -> vector<8x128xf32>
    %31 = arith.addf %29, %30 : vector<8x128xf32>
    %32 = math.tanh %31 : vector<8x128xf32>
    %33 = arith.index_cast %c1_i32 : i32 to index
    %c0_26 = arith.constant 0 : index
    %c0_27 = arith.constant 0 : index
    %34 = vector.load %arg7[%33, %c0_26, %c0_27] : memref<8x8x128xf32, #tpu.memory_space<vmem>>, vector<1x8x128xf32>
    %35 = vector.shape_cast %34 : vector<1x8x128xf32> to vector<8x128xf32>
    %36 = vector.shape_cast %32 : vector<8x128xf32> to vector<1x8x128xf32>
    tpu.vector_store %arg7[%33, %c0_26, %c0_27], %36 {strides = array<i32>} : memref<8x8x128xf32, #tpu.memory_space<vmem>>, vector<1x8x128xf32>,
    %c2_i32 = arith.constant 2 : i32
    %37 = arith.index_cast %c2_i32 : i32 to index
    %c0_28 = arith.constant 0 : index
    %c0_29 = arith.constant 0 : index
    %38 = vector.load %arg7[%37, %c0_28, %c0_29] : memref<8x8x128xf32, #tpu.memory_space<vmem>>, vector<1x8x128xf32>
    %39 = vector.shape_cast %38 : vector<1x8x128xf32> to vector<8x128xf32>
    %cst_30 = arith.constant dense<0.000000e+00> : vector<8x128xf32>
    %40 = tpu.matmul %32, %14, %cst_30 {dimension_numbers = #tpu.dot_dimension_numbers<[1], [0], [0], [1], [0, 0, 1, 1], [], []>} : vector<8x128xf32>, vector<128x128xf32>, vector<8x128xf32> -> vector<8x128xf32>
    %41 = arith.addf %39, %40 : vector<8x128xf32>
    %42 = math.tanh %41 : vector<8x128xf32>
    %43 = arith.index_cast %c2_i32 : i32 to index
    %c0_31 = arith.constant 0 : index
    %c0_32 = arith.constant 0 : index
    %44 = vector.load %arg7[%43, %c0_31, %c0_32] : memref<8x8x128xf32, #tpu.memory_space<vmem>>, vector<1x8x128xf32>
    %45 = vector.shape_cast %44 : vector<1x8x128xf32> to vector<8x128xf32>
    %46 = vector.shape_cast %42 : vector<8x128xf32> to vector<1x8x128xf32>
    tpu.vector_store %arg7[%43, %c0_31, %c0_32], %46 {strides = array<i32>} : memref<8x8x128xf32, #tpu.memory_space<vmem>>, vector<1x8x128xf32>,
    %c3_i32 = arith.constant 3 : i32
    %47 = arith.index_cast %c3_i32 : i32 to index
    %c0_33 = arith.constant 0 : index
    %c0_34 = arith.constant 0 : index
    %48 = vector.load %arg7[%47, %c0_33, %c0_34] : memref<8x8x128xf32, #tpu.memory_space<vmem>>, vector<1x8x128xf32>
    %49 = vector.shape_cast %48 : vector<1x8x128xf32> to vector<8x128xf32>
    %cst_35 = arith.constant dense<0.000000e+00> : vector<8x128xf32>
    %50 = tpu.matmul %42, %14, %cst_35 {dimension_numbers = #tpu.dot_dimension_numbers<[1], [0], [0], [1], [0, 0, 1, 1], [], []>} : vector<8x128xf32>, vector<128x128xf32>, vector<8x128xf32> -> vector<8x128xf32>
    %51 = arith.addf %49, %50 : vector<8x128xf32>
    %52 = math.tanh %51 : vector<8x128xf32>
    %53 = arith.index_cast %c3_i32 : i32 to index
    %c0_36 = arith.constant 0 : index
    %c0_37 = arith.constant 0 : index
    %54 = vector.load %arg7[%53, %c0_36, %c0_37] : memref<8x8x128xf32, #tpu.memory_space<vmem>>, vector<1x8x128xf32>
    %55 = vector.shape_cast %54 : vector<1x8x128xf32> to vector<8x128xf32>
    %56 = vector.shape_cast %52 : vector<8x128xf32> to vector<1x8x128xf32>
    tpu.vector_store %arg7[%53, %c0_36, %c0_37], %56 {strides = array<i32>} : memref<8x8x128xf32, #tpu.memory_space<vmem>>, vector<1x8x128xf32>,
    %c4_i32 = arith.constant 4 : i32
    %57 = arith.index_cast %c4_i32 : i32 to index
    %c0_38 = arith.constant 0 : index
    %c0_39 = arith.constant 0 : index
    %58 = vector.load %arg7[%57, %c0_38, %c0_39] : memref<8x8x128xf32, #tpu.memory_space<vmem>>, vector<1x8x128xf32>
    %59 = vector.shape_cast %58 : vector<1x8x128xf32> to vector<8x128xf32>
    %cst_40 = arith.constant dense<0.000000e+00> : vector<8x128xf32>
    %60 = tpu.matmul %52, %14, %cst_40 {dimension_numbers = #tpu.dot_dimension_numbers<[1], [0], [0], [1], [0, 0, 1, 1], [], []>} : vector<8x128xf32>, vector<128x128xf32>, vector<8x128xf32> -> vector<8x128xf32>
    %61 = arith.addf %59, %60 : vector<8x128xf32>
    %62 = math.tanh %61 : vector<8x128xf32>
    %63 = arith.index_cast %c4_i32 : i32 to index
    %c0_41 = arith.constant 0 : index
    %c0_42 = arith.constant 0 : index
    %64 = vector.load %arg7[%63, %c0_41, %c0_42] : memref<8x8x128xf32, #tpu.memory_space<vmem>>, vector<1x8x128xf32>
    %65 = vector.shape_cast %64 : vector<1x8x128xf32> to vector<8x128xf32>
    %66 = vector.shape_cast %62 : vector<8x128xf32> to vector<1x8x128xf32>
    tpu.vector_store %arg7[%63, %c0_41, %c0_42], %66 {strides = array<i32>} : memref<8x8x128xf32, #tpu.memory_space<vmem>>, vector<1x8x128xf32>,
    %c5_i32 = arith.constant 5 : i32
    %67 = arith.index_cast %c5_i32 : i32 to index
    %c0_43 = arith.constant 0 : index
    %c0_44 = arith.constant 0 : index
    %68 = vector.load %arg7[%67, %c0_43, %c0_44] : memref<8x8x128xf32, #tpu.memory_space<vmem>>, vector<1x8x128xf32>
    %69 = vector.shape_cast %68 : vector<1x8x128xf32> to vector<8x128xf32>
    %cst_45 = arith.constant dense<0.000000e+00> : vector<8x128xf32>
    %70 = tpu.matmul %62, %14, %cst_45 {dimension_numbers = #tpu.dot_dimension_numbers<[1], [0], [0], [1], [0, 0, 1, 1], [], []>} : vector<8x128xf32>, vector<128x128xf32>, vector<8x128xf32> -> vector<8x128xf32>
    %71 = arith.addf %69, %70 : vector<8x128xf32>
    %72 = math.tanh %71 : vector<8x128xf32>
    %73 = arith.index_cast %c5_i32 : i32 to index
    %c0_46 = arith.constant 0 : index
    %c0_47 = arith.constant 0 : index
    %74 = vector.load %arg7[%73, %c0_46, %c0_47] : memref<8x8x128xf32, #tpu.memory_space<vmem>>, vector<1x8x128xf32>
    %75 = vector.shape_cast %74 : vector<1x8x128xf32> to vector<8x128xf32>
    %76 = vector.shape_cast %72 : vector<8x128xf32> to vector<1x8x128xf32>
    tpu.vector_store %arg7[%73, %c0_46, %c0_47], %76 {strides = array<i32>} : memref<8x8x128xf32, #tpu.memory_space<vmem>>, vector<1x8x128xf32>,
    %c6_i32 = arith.constant 6 : i32
    %77 = arith.index_cast %c6_i32 : i32 to index
    %c0_48 = arith.constant 0 : index
    %c0_49 = arith.constant 0 : index
    %78 = vector.load %arg7[%77, %c0_48, %c0_49] : memref<8x8x128xf32, #tpu.memory_space<vmem>>, vector<1x8x128xf32>
    %79 = vector.shape_cast %78 : vector<1x8x128xf32> to vector<8x128xf32>
    %cst_50 = arith.constant dense<0.000000e+00> : vector<8x128xf32>
    %80 = tpu.matmul %72, %14, %cst_50 {dimension_numbers = #tpu.dot_dimension_numbers<[1], [0], [0], [1], [0, 0, 1, 1], [], []>} : vector<8x128xf32>, vector<128x128xf32>, vector<8x128xf32> -> vector<8x128xf32>
    %81 = arith.addf %79, %80 : vector<8x128xf32>
    %82 = math.tanh %81 : vector<8x128xf32>
    %83 = arith.index_cast %c6_i32 : i32 to index
    %c0_51 = arith.constant 0 : index
    %c0_52 = arith.constant 0 : index
    %84 = vector.load %arg7[%83, %c0_51, %c0_52] : memref<8x8x128xf32, #tpu.memory_space<vmem>>, vector<1x8x128xf32>
    %85 = vector.shape_cast %84 : vector<1x8x128xf32> to vector<8x128xf32>
    %86 = vector.shape_cast %82 : vector<8x128xf32> to vector<1x8x128xf32>
    tpu.vector_store %arg7[%83, %c0_51, %c0_52], %86 {strides = array<i32>} : memref<8x8x128xf32, #tpu.memory_space<vmem>>, vector<1x8x128xf32>,
    %c7_i32 = arith.constant 7 : i32
    %87 = arith.index_cast %c7_i32 : i32 to index
    %c0_53 = arith.constant 0 : index
    %c0_54 = arith.constant 0 : index
    %88 = vector.load %arg7[%87, %c0_53, %c0_54] : memref<8x8x128xf32, #tpu.memory_space<vmem>>, vector<1x8x128xf32>
    %89 = vector.shape_cast %88 : vector<1x8x128xf32> to vector<8x128xf32>
    %cst_55 = arith.constant dense<0.000000e+00> : vector<8x128xf32>
    %90 = tpu.matmul %82, %14, %cst_55 {dimension_numbers = #tpu.dot_dimension_numbers<[1], [0], [0], [1], [0, 0, 1, 1], [], []>} : vector<8x128xf32>, vector<128x128xf32>, vector<8x128xf32> -> vector<8x128xf32>
    %91 = arith.addf %89, %90 : vector<8x128xf32>
    %92 = math.tanh %91 : vector<8x128xf32>
    %93 = arith.index_cast %c7_i32 : i32 to index
    %c0_56 = arith.constant 0 : index
    %c0_57 = arith.constant 0 : index
    %94 = vector.load %arg7[%93, %c0_56, %c0_57] : memref<8x8x128xf32, #tpu.memory_space<vmem>>, vector<1x8x128xf32>
    %95 = vector.shape_cast %94 : vector<1x8x128xf32> to vector<8x128xf32>
    %96 = vector.shape_cast %92 : vector<8x128xf32> to vector<1x8x128xf32>
    tpu.vector_store %arg7[%93, %c0_56, %c0_57], %96 {strides = array<i32>} : memref<8x8x128xf32, #tpu.memory_space<vmem>>, vector<1x8x128xf32>,
    %c8_i32 = arith.constant 8 : i32
    %c0_58 = arith.constant 0 : index
    %c0_59 = arith.constant 0 : index
    %c0_60 = arith.constant 0 : index
    %97 = vector.load %arg9[%c0_58, %c0_59, %c0_60] : memref<2x8x128xf32, #tpu.memory_space<vmem>>, vector<1x8x128xf32>
    %98 = vector.shape_cast %97 : vector<1x8x128xf32> to vector<8x128xf32>
    %99 = vector.shape_cast %92 : vector<8x128xf32> to vector<1x8x128xf32>
    tpu.vector_store %arg9[%c0_58, %c0_59, %c0_60], %99 {strides = array<i32>} : memref<2x8x128xf32, #tpu.memory_space<vmem>>, vector<1x8x128xf32>,
    %c0_i32_61 = arith.constant 0 : i32
    %100 = arith.cmpi eq, %arg1, %c0_i32_61 : i32
    %101 = arith.extui %100 : i1 to i32
    %c0_i32_62 = arith.constant 0 : i32
    %102 = arith.cmpi ne, %101, %c0_i32_62 : i32
    scf.if %102 {
      %c7 = arith.constant 7 : index
      %c0_135 = arith.constant 0 : index
      %c0_136 = arith.constant 0 : index
      %204 = vector.load %arg7[%c7, %c0_135, %c0_136] : memref<8x8x128xf32, #tpu.memory_space<vmem>>, vector<1x8x128xf32>
      %205 = vector.shape_cast %204 : vector<1x8x128xf32> to vector<8x128xf32>
      %c0_137 = arith.constant 0 : index
      %c0_138 = arith.constant 0 : index
      %c0_139 = arith.constant 0 : index
      %206 = vector.load %arg8[%c0_137, %c0_138, %c0_139] : memref<2x8x128xf32, #tpu.memory_space<vmem>>, vector<1x8x128xf32>
      %207 = vector.shape_cast %206 : vector<1x8x128xf32> to vector<8x128xf32>
      %208 = vector.shape_cast %205 : vector<8x128xf32> to vector<1x8x128xf32>
      tpu.vector_store %arg8[%c0_137, %c0_138, %c0_139], %208 {strides = array<i32>} : memref<2x8x128xf32, #tpu.memory_space<vmem>>, vector<1x8x128xf32>,
    } else {
    }
    %c0_63 = arith.constant 0 : index
    %c0_64 = arith.constant 0 : index
    %c0_65 = arith.constant 0 : index
    %103 = vector.load %arg7[%c0_63, %c0_64, %c0_65] : memref<8x8x128xf32, #tpu.memory_space<vmem>>, vector<8x8x128xf32>
    %104 = vector.shape_cast %103 : vector<8x8x128xf32> to vector<64x128xf32>
    %c0_66 = arith.constant 0 : index
    %c0_67 = arith.constant 0 : index
    %c0_68 = arith.constant 0 : index
    %105 = vector.load %arg4[%c0_66, %c0_67, %c0_68] : memref<1x128x128xf32, #tpu.memory_space<vmem>>, vector<1x128x128xf32>
    %106 = vector.shape_cast %105 : vector<1x128x128xf32> to vector<128x128xf32>
    %cst_69 = arith.constant dense<0.000000e+00> : vector<64x128xf32>
    %107 = tpu.matmul %104, %106, %cst_69 {dimension_numbers = #tpu.dot_dimension_numbers<[1], [0], [0], [1], [0, 0, 1, 1], [], []>} : vector<64x128xf32>, vector<128x128xf32>, vector<64x128xf32> -> vector<64x128xf32>
    %c1 = arith.constant 1 : index
    %c0_70 = arith.constant 0 : index
    %c0_71 = arith.constant 0 : index
    %108 = vector.load %arg6[%c1, %c0_70, %c0_71] : memref<2x1x128xf32, #tpu.memory_space<vmem>>, vector<1x1x128xf32>
    %109 = vector.shape_cast %108 : vector<1x1x128xf32> to vector<1x128xf32>
    %110 = vector.broadcast %109 : vector<1x128xf32> to vector<64x128xf32>
    %111 = arith.addf %107, %110 : vector<64x128xf32>
    %112 = vector.shape_cast %111 : vector<64x128xf32> to vector<8x8x128xf32>
    %c0_72 = arith.constant 0 : index
    %c0_73 = arith.constant 0 : index
    %c0_74 = arith.constant 0 : index
    %113 = vector.load %arg7[%c0_72, %c0_73, %c0_74] : memref<8x8x128xf32, #tpu.memory_space<vmem>>, vector<8x8x128xf32>
    tpu.vector_store %arg7[%c0_72, %c0_73, %c0_74], %112 {strides = array<i32>} : memref<8x8x128xf32, #tpu.memory_space<vmem>>, vector<8x8x128xf32>,
    %c1_75 = arith.constant 1 : index
    %c0_76 = arith.constant 0 : index
    %c0_77 = arith.constant 0 : index
    %114 = vector.load %arg5[%c1_75, %c0_76, %c0_77] : memref<2x128x128xf32, #tpu.memory_space<vmem>>, vector<1x128x128xf32>
    %115 = vector.shape_cast %114 : vector<1x128x128xf32> to vector<128x128xf32>
    %c1_78 = arith.constant 1 : index
    %c0_79 = arith.constant 0 : index
    %c0_80 = arith.constant 0 : index
    %116 = vector.load %arg9[%c1_78, %c0_79, %c0_80] : memref<2x8x128xf32, #tpu.memory_space<vmem>>, vector<1x8x128xf32>
    %117 = vector.shape_cast %116 : vector<1x8x128xf32> to vector<8x128xf32>
    %c0_i32_81 = arith.constant 0 : i32
    %118 = arith.index_cast %c0_i32_81 : i32 to index
    %c0_82 = arith.constant 0 : index
    %c0_83 = arith.constant 0 : index
    %119 = vector.load %arg7[%118, %c0_82, %c0_83] : memref<8x8x128xf32, #tpu.memory_space<vmem>>, vector<1x8x128xf32>
    %120 = vector.shape_cast %119 : vector<1x8x128xf32> to vector<8x128xf32>
    %cst_84 = arith.constant dense<0.000000e+00> : vector<8x128xf32>
    %121 = tpu.matmul %117, %115, %cst_84 {dimension_numbers = #tpu.dot_dimension_numbers<[1], [0], [0], [1], [0, 0, 1, 1], [], []>} : vector<8x128xf32>, vector<128x128xf32>, vector<8x128xf32> -> vector<8x128xf32>
    %122 = arith.addf %120, %121 : vector<8x128xf32>
    %123 = math.tanh %122 : vector<8x128xf32>
    %124 = arith.index_cast %c0_i32_81 : i32 to index
    %c0_85 = arith.constant 0 : index
    %c0_86 = arith.constant 0 : index
    %125 = vector.load %arg7[%124, %c0_85, %c0_86] : memref<8x8x128xf32, #tpu.memory_space<vmem>>, vector<1x8x128xf32>
    %126 = vector.shape_cast %125 : vector<1x8x128xf32> to vector<8x128xf32>
    %127 = vector.shape_cast %123 : vector<8x128xf32> to vector<1x8x128xf32>
    tpu.vector_store %arg7[%124, %c0_85, %c0_86], %127 {strides = array<i32>} : memref<8x8x128xf32, #tpu.memory_space<vmem>>, vector<1x8x128xf32>,
    %c1_i32_87 = arith.constant 1 : i32
    %128 = arith.index_cast %c1_i32_87 : i32 to index
    %c0_88 = arith.constant 0 : index
    %c0_89 = arith.constant 0 : index
    %129 = vector.load %arg7[%128, %c0_88, %c0_89] : memref<8x8x128xf32, #tpu.memory_space<vmem>>, vector<1x8x128xf32>
    %130 = vector.shape_cast %129 : vector<1x8x128xf32> to vector<8x128xf32>
    %cst_90 = arith.constant dense<0.000000e+00> : vector<8x128xf32>
    %131 = tpu.matmul %123, %115, %cst_90 {dimension_numbers = #tpu.dot_dimension_numbers<[1], [0], [0], [1], [0, 0, 1, 1], [], []>} : vector<8x128xf32>, vector<128x128xf32>, vector<8x128xf32> -> vector<8x128xf32>
    %132 = arith.addf %130, %131 : vector<8x128xf32>
    %133 = math.tanh %132 : vector<8x128xf32>
    %134 = arith.index_cast %c1_i32_87 : i32 to index
    %c0_91 = arith.constant 0 : index
    %c0_92 = arith.constant 0 : index
    %135 = vector.load %arg7[%134, %c0_91, %c0_92] : memref<8x8x128xf32, #tpu.memory_space<vmem>>, vector<1x8x128xf32>
    %136 = vector.shape_cast %135 : vector<1x8x128xf32> to vector<8x128xf32>
    %137 = vector.shape_cast %133 : vector<8x128xf32> to vector<1x8x128xf32>
    tpu.vector_store %arg7[%134, %c0_91, %c0_92], %137 {strides = array<i32>} : memref<8x8x128xf32, #tpu.memory_space<vmem>>, vector<1x8x128xf32>,
    %c2_i32_93 = arith.constant 2 : i32
    %138 = arith.index_cast %c2_i32_93 : i32 to index
    %c0_94 = arith.constant 0 : index
    %c0_95 = arith.constant 0 : index
    %139 = vector.load %arg7[%138, %c0_94, %c0_95] : memref<8x8x128xf32, #tpu.memory_space<vmem>>, vector<1x8x128xf32>
    %140 = vector.shape_cast %139 : vector<1x8x128xf32> to vector<8x128xf32>
    %cst_96 = arith.constant dense<0.000000e+00> : vector<8x128xf32>
    %141 = tpu.matmul %133, %115, %cst_96 {dimension_numbers = #tpu.dot_dimension_numbers<[1], [0], [0], [1], [0, 0, 1, 1], [], []>} : vector<8x128xf32>, vector<128x128xf32>, vector<8x128xf32> -> vector<8x128xf32>
    %142 = arith.addf %140, %141 : vector<8x128xf32>
    %143 = math.tanh %142 : vector<8x128xf32>
    %144 = arith.index_cast %c2_i32_93 : i32 to index
    %c0_97 = arith.constant 0 : index
    %c0_98 = arith.constant 0 : index
    %145 = vector.load %arg7[%144, %c0_97, %c0_98] : memref<8x8x128xf32, #tpu.memory_space<vmem>>, vector<1x8x128xf32>
    %146 = vector.shape_cast %145 : vector<1x8x128xf32> to vector<8x128xf32>
    %147 = vector.shape_cast %143 : vector<8x128xf32> to vector<1x8x128xf32>
    tpu.vector_store %arg7[%144, %c0_97, %c0_98], %147 {strides = array<i32>} : memref<8x8x128xf32, #tpu.memory_space<vmem>>, vector<1x8x128xf32>,
    %c3_i32_99 = arith.constant 3 : i32
    %148 = arith.index_cast %c3_i32_99 : i32 to index
    %c0_100 = arith.constant 0 : index
    %c0_101 = arith.constant 0 : index
    %149 = vector.load %arg7[%148, %c0_100, %c0_101] : memref<8x8x128xf32, #tpu.memory_space<vmem>>, vector<1x8x128xf32>
    %150 = vector.shape_cast %149 : vector<1x8x128xf32> to vector<8x128xf32>
    %cst_102 = arith.constant dense<0.000000e+00> : vector<8x128xf32>
    %151 = tpu.matmul %143, %115, %cst_102 {dimension_numbers = #tpu.dot_dimension_numbers<[1], [0], [0], [1], [0, 0, 1, 1], [], []>} : vector<8x128xf32>, vector<128x128xf32>, vector<8x128xf32> -> vector<8x128xf32>
    %152 = arith.addf %150, %151 : vector<8x128xf32>
    %153 = math.tanh %152 : vector<8x128xf32>
    %154 = arith.index_cast %c3_i32_99 : i32 to index
    %c0_103 = arith.constant 0 : index
    %c0_104 = arith.constant 0 : index
    %155 = vector.load %arg7[%154, %c0_103, %c0_104] : memref<8x8x128xf32, #tpu.memory_space<vmem>>, vector<1x8x128xf32>
    %156 = vector.shape_cast %155 : vector<1x8x128xf32> to vector<8x128xf32>
    %157 = vector.shape_cast %153 : vector<8x128xf32> to vector<1x8x128xf32>
    tpu.vector_store %arg7[%154, %c0_103, %c0_104], %157 {strides = array<i32>} : memref<8x8x128xf32, #tpu.memory_space<vmem>>, vector<1x8x128xf32>,
    %c4_i32_105 = arith.constant 4 : i32
    %158 = arith.index_cast %c4_i32_105 : i32 to index
    %c0_106 = arith.constant 0 : index
    %c0_107 = arith.constant 0 : index
    %159 = vector.load %arg7[%158, %c0_106, %c0_107] : memref<8x8x128xf32, #tpu.memory_space<vmem>>, vector<1x8x128xf32>
    %160 = vector.shape_cast %159 : vector<1x8x128xf32> to vector<8x128xf32>
    %cst_108 = arith.constant dense<0.000000e+00> : vector<8x128xf32>
    %161 = tpu.matmul %153, %115, %cst_108 {dimension_numbers = #tpu.dot_dimension_numbers<[1], [0], [0], [1], [0, 0, 1, 1], [], []>} : vector<8x128xf32>, vector<128x128xf32>, vector<8x128xf32> -> vector<8x128xf32>
    %162 = arith.addf %160, %161 : vector<8x128xf32>
    %163 = math.tanh %162 : vector<8x128xf32>
    %164 = arith.index_cast %c4_i32_105 : i32 to index
    %c0_109 = arith.constant 0 : index
    %c0_110 = arith.constant 0 : index
    %165 = vector.load %arg7[%164, %c0_109, %c0_110] : memref<8x8x128xf32, #tpu.memory_space<vmem>>, vector<1x8x128xf32>
    %166 = vector.shape_cast %165 : vector<1x8x128xf32> to vector<8x128xf32>
    %167 = vector.shape_cast %163 : vector<8x128xf32> to vector<1x8x128xf32>
    tpu.vector_store %arg7[%164, %c0_109, %c0_110], %167 {strides = array<i32>} : memref<8x8x128xf32, #tpu.memory_space<vmem>>, vector<1x8x128xf32>,
    %c5_i32_111 = arith.constant 5 : i32
    %168 = arith.index_cast %c5_i32_111 : i32 to index
    %c0_112 = arith.constant 0 : index
    %c0_113 = arith.constant 0 : index
    %169 = vector.load %arg7[%168, %c0_112, %c0_113] : memref<8x8x128xf32, #tpu.memory_space<vmem>>, vector<1x8x128xf32>
    %170 = vector.shape_cast %169 : vector<1x8x128xf32> to vector<8x128xf32>
    %cst_114 = arith.constant dense<0.000000e+00> : vector<8x128xf32>
    %171 = tpu.matmul %163, %115, %cst_114 {dimension_numbers = #tpu.dot_dimension_numbers<[1], [0], [0], [1], [0, 0, 1, 1], [], []>} : vector<8x128xf32>, vector<128x128xf32>, vector<8x128xf32> -> vector<8x128xf32>
    %172 = arith.addf %170, %171 : vector<8x128xf32>
    %173 = math.tanh %172 : vector<8x128xf32>
    %174 = arith.index_cast %c5_i32_111 : i32 to index
    %c0_115 = arith.constant 0 : index
    %c0_116 = arith.constant 0 : index
    %175 = vector.load %arg7[%174, %c0_115, %c0_116] : memref<8x8x128xf32, #tpu.memory_space<vmem>>, vector<1x8x128xf32>
    %176 = vector.shape_cast %175 : vector<1x8x128xf32> to vector<8x128xf32>
    %177 = vector.shape_cast %173 : vector<8x128xf32> to vector<1x8x128xf32>
    tpu.vector_store %arg7[%174, %c0_115, %c0_116], %177 {strides = array<i32>} : memref<8x8x128xf32, #tpu.memory_space<vmem>>, vector<1x8x128xf32>,
    %c6_i32_117 = arith.constant 6 : i32
    %178 = arith.index_cast %c6_i32_117 : i32 to index
    %c0_118 = arith.constant 0 : index
    %c0_119 = arith.constant 0 : index
    %179 = vector.load %arg7[%178, %c0_118, %c0_119] : memref<8x8x128xf32, #tpu.memory_space<vmem>>, vector<1x8x128xf32>
    %180 = vector.shape_cast %179 : vector<1x8x128xf32> to vector<8x128xf32>
    %cst_120 = arith.constant dense<0.000000e+00> : vector<8x128xf32>
    %181 = tpu.matmul %173, %115, %cst_120 {dimension_numbers = #tpu.dot_dimension_numbers<[1], [0], [0], [1], [0, 0, 1, 1], [], []>} : vector<8x128xf32>, vector<128x128xf32>, vector<8x128xf32> -> vector<8x128xf32>
    %182 = arith.addf %180, %181 : vector<8x128xf32>
    %183 = math.tanh %182 : vector<8x128xf32>
    %184 = arith.index_cast %c6_i32_117 : i32 to index
    %c0_121 = arith.constant 0 : index
    %c0_122 = arith.constant 0 : index
    %185 = vector.load %arg7[%184, %c0_121, %c0_122] : memref<8x8x128xf32, #tpu.memory_space<vmem>>, vector<1x8x128xf32>
    %186 = vector.shape_cast %185 : vector<1x8x128xf32> to vector<8x128xf32>
    %187 = vector.shape_cast %183 : vector<8x128xf32> to vector<1x8x128xf32>
    tpu.vector_store %arg7[%184, %c0_121, %c0_122], %187 {strides = array<i32>} : memref<8x8x128xf32, #tpu.memory_space<vmem>>, vector<1x8x128xf32>,
    %c7_i32_123 = arith.constant 7 : i32
    %188 = arith.index_cast %c7_i32_123 : i32 to index
    %c0_124 = arith.constant 0 : index
    %c0_125 = arith.constant 0 : index
    %189 = vector.load %arg7[%188, %c0_124, %c0_125] : memref<8x8x128xf32, #tpu.memory_space<vmem>>, vector<1x8x128xf32>
    %190 = vector.shape_cast %189 : vector<1x8x128xf32> to vector<8x128xf32>
    %cst_126 = arith.constant dense<0.000000e+00> : vector<8x128xf32>
    %191 = tpu.matmul %183, %115, %cst_126 {dimension_numbers = #tpu.dot_dimension_numbers<[1], [0], [0], [1], [0, 0, 1, 1], [], []>} : vector<8x128xf32>, vector<128x128xf32>, vector<8x128xf32> -> vector<8x128xf32>
    %192 = arith.addf %190, %191 : vector<8x128xf32>
    %193 = math.tanh %192 : vector<8x128xf32>
    %194 = arith.index_cast %c7_i32_123 : i32 to index
    %c0_127 = arith.constant 0 : index
    %c0_128 = arith.constant 0 : index
    %195 = vector.load %arg7[%194, %c0_127, %c0_128] : memref<8x8x128xf32, #tpu.memory_space<vmem>>, vector<1x8x128xf32>
    %196 = vector.shape_cast %195 : vector<1x8x128xf32> to vector<8x128xf32>
    %197 = vector.shape_cast %193 : vector<8x128xf32> to vector<1x8x128xf32>
    tpu.vector_store %arg7[%194, %c0_127, %c0_128], %197 {strides = array<i32>} : memref<8x8x128xf32, #tpu.memory_space<vmem>>, vector<1x8x128xf32>,
    %c8_i32_129 = arith.constant 8 : i32
    %c1_130 = arith.constant 1 : index
    %c0_131 = arith.constant 0 : index
    %c0_132 = arith.constant 0 : index
    %198 = vector.load %arg9[%c1_130, %c0_131, %c0_132] : memref<2x8x128xf32, #tpu.memory_space<vmem>>, vector<1x8x128xf32>
    %199 = vector.shape_cast %198 : vector<1x8x128xf32> to vector<8x128xf32>
    %200 = vector.shape_cast %193 : vector<8x128xf32> to vector<1x8x128xf32>
    tpu.vector_store %arg9[%c1_130, %c0_131, %c0_132], %200 {strides = array<i32>} : memref<2x8x128xf32, #tpu.memory_space<vmem>>, vector<1x8x128xf32>,
    %c0_i32_133 = arith.constant 0 : i32
    %201 = arith.cmpi eq, %arg1, %c0_i32_133 : i32
    %202 = arith.extui %201 : i1 to i32
    %c0_i32_134 = arith.constant 0 : i32
    %203 = arith.cmpi ne, %202, %c0_i32_134 : i32
    scf.if %203 {
      %c7 = arith.constant 7 : index
      %c0_135 = arith.constant 0 : index
      %c0_136 = arith.constant 0 : index
      %204 = vector.load %arg7[%c7, %c0_135, %c0_136] : memref<8x8x128xf32, #tpu.memory_space<vmem>>, vector<1x8x128xf32>
      %205 = vector.shape_cast %204 : vector<1x8x128xf32> to vector<8x128xf32>
      %c1_137 = arith.constant 1 : index
      %c0_138 = arith.constant 0 : index
      %c0_139 = arith.constant 0 : index
      %206 = vector.load %arg8[%c1_137, %c0_138, %c0_139] : memref<2x8x128xf32, #tpu.memory_space<vmem>>, vector<1x8x128xf32>
      %207 = vector.shape_cast %206 : vector<1x8x128xf32> to vector<8x128xf32>
      %208 = vector.shape_cast %205 : vector<8x128xf32> to vector<1x8x128xf32>
      tpu.vector_store %arg8[%c1_137, %c0_138, %c0_139], %208 {strides = array<i32>} : memref<2x8x128xf32, #tpu.memory_space<vmem>>, vector<1x8x128xf32>,
    } else {
    }
    return
  }
  func.func @transform_0(%arg0: i32, %arg1: i32) -> (i32, i32, i32) {
    %c0_i32 = arith.constant 0 : i32
    %c0_i32_0 = arith.constant 0 : i32
    return %arg1, %arg0, %c0_i32 : i32, i32, i32
  }
  func.func @transform_1(%arg0: i32, %arg1: i32) -> (i32, i32) {
    %c0_i32 = arith.constant 0 : i32
    %c0_i32_0 = arith.constant 0 : i32
    %c0_i32_1 = arith.constant 0 : i32
    return %c0_i32, %c0_i32_0 : i32, i32
  }
  func.func @transform_2(%arg0: i32, %arg1: i32) -> (i32, i32, i32) {
    %c0_i32 = arith.constant 0 : i32
    %c0_i32_0 = arith.constant 0 : i32
    %c0_i32_1 = arith.constant 0 : i32
    %c0_i32_2 = arith.constant 0 : i32
    return %c0_i32, %c0_i32_0, %c0_i32_1 : i32, i32, i32
  }
  func.func @transform_3(%arg0: i32, %arg1: i32) -> (i32, i32, i32) {
    %c0_i32 = arith.constant 0 : i32
    %c0_i32_0 = arith.constant 0 : i32
    %c0_i32_1 = arith.constant 0 : i32
    %c0_i32_2 = arith.constant 0 : i32
    return %c0_i32, %c0_i32_0, %c0_i32_1 : i32, i32, i32
  }
  func.func @transform_4(%arg0: i32, %arg1: i32) -> (i32, i32, i32) {
    %c0_i32 = arith.constant 0 : i32
    %c0_i32_0 = arith.constant 0 : i32
    %c0_i32_1 = arith.constant 0 : i32
    %c0_i32_2 = arith.constant 0 : i32
    return %c0_i32, %c0_i32_0, %c0_i32_1 : i32, i32, i32
  }
  func.func @transform_5(%arg0: i32, %arg1: i32) -> (i32, i32, i32) {
    %c0_i32 = arith.constant 0 : i32
    %c0_i32_0 = arith.constant 0 : i32
    return %arg1, %arg0, %c0_i32 : i32, i32, i32
  }
  func.func @transform_6(%arg0: i32, %arg1: i32) -> (i32, i32, i32) {
    %c0_i32 = arith.constant 0 : i32
    %c0_i32_0 = arith.constant 0 : i32
    %c0_i32_1 = arith.constant 0 : i32
    return %c0_i32, %arg0, %c0_i32_0 : i32, i32, i32
  }
}

</mosaic_0001>

<llo_original>
// kernel: tpu_custom_call.1
$region0: #{tpu_custom_call.1}
  #allocation0 [shape = 'u32[]', space=smem, size = 0x4, offset = 0x4, fixed_abs, tag = 'smem constant byte address 0x4 - core index']
  #allocation1 [shape = 'u32[144,128]{1,0:T(1,128)}', space=vmem, size = 0x12000, scoped, tag = 'internal scratch']
  #allocation2 [shape = 'f32[2,8,128]{2,1,0:T(8,128)}', space=vmem, size = 0x2000, scoped, tag = 'scratch operand']
  %s0 = inlined_call_operand.hbm [shape: f32[8,8,128], index: 0, kind: input, shape index: {}]
  %s1 = inlined_call_operand.hbm [shape: f32[128,128], index: 1, kind: input, shape index: {}]
  %s2 = inlined_call_operand.hbm [shape: f32[1,128,128], index: 2, kind: input, shape index: {}]
  %s3 = inlined_call_operand.hbm [shape: f32[2,128,128], index: 3, kind: input, shape index: {}]
  %s4 = inlined_call_operand.vmem [shape: f32[2,1,128], index: 4, kind: input, shape index: {}]
  %s5 = inlined_call_operand.hbm [shape: f32[8,8,128], index: 5, kind: output, shape index: {0}]
  %s6 = inlined_call_operand.hbm [shape: f32[2,8,128], index: 6, kind: output, shape index: {1}]
  %7 = xla_tuple %s5, %s6
  %s8 = sld [smem:[#allocation0]]
  $region66: #{tpu_custom_call.1} parent=0
    _
  %s10 = ssub.s32 1, %s8
  %s11 = scalar_select 0, %s10, %s8
  $region1: #{tpu_custom_call.1} parent=0
    #allocation3 [shape = 'u8[32768]{0}', space=vmem, size = 0x8000, scoped, tag = 'input window, operand 0, single buffered']
    #allocation4 [shape = 's32[1]{0}', space=sflag, size = 0x4, scoped, tag = 'scoped memory for tpu_custom_call.1']
    #allocation5 [shape = 's32[1]{0}', space=sflag, size = 0x4, scoped, tag = 'scoped memory for tpu_custom_call.1']
    #allocation6 [shape = 'u8[65536]{0}', space=vmem, size = 0x10000, scoped, tag = 'input window, operand 1, single buffered']
    #allocation7 [shape = 's32[1]{0}', space=sflag, size = 0x4, scoped, tag = 'scoped memory for tpu_custom_call.1']
    #allocation8 [shape = 'u8[65536]{0}', space=vmem, size = 0x10000, scoped, tag = 'input window, operand 2, single buffered']
    #allocation9 [shape = 'u8[131072]{0}', space=vmem, size = 0x20000, scoped, tag = 'input window, operand 3, single buffered']
    #allocation10 [shape = 's32[1]{0}', space=sflag, size = 0x4, scoped, tag = 'scoped memory for tpu_custom_call.1']
    #allocation11 [shape = 'u8[32768]{0}', space=vmem, size = 0x8000, scoped, tag = 'output window, operand 0, single buffered']
    #allocation12 [shape = 'u8[8192]{0}', space=vmem, size = 0x2000, scoped, tag = 'output window, operand 1, single buffered']
    #allocation13 [shape = 's32[1]{0}', space=sflag, size = 0x4, scoped, tag = 'scoped memory for tpu_custom_call.1']
    %12 = vsyncpa [#allocation4], 0
    %13 = vsyncpa [#allocation7], 0
    %14 = vsyncpa [#allocation10], 0
    %15 = vsyncpa [#allocation5], 0
    %16 = vsyncpa [#allocation13], 0
    // Predicated region
    $region2: #{tpu_custom_call.1} parent=1 // pred_check
      _
    $region3: #{tpu_custom_call.1} parent=1 // pred_check_branch
      %18 = sbr.rel (0) target = $region5
    $region4: #{tpu_custom_call.1} parent=1 // pred_region
      %s20 = ssub.s32 1024, 1024
      %21 = vsyncadd [#allocation4], %s20
      %s22 = sshll.u32 [#allocation3], 4
      %s23 = int_to_ptr.vmem [resolvable:$true] %s22
      %28 = dma.hbm_to_vmem [thread:$0]  %s0, 1024, %s23, [#allocation4], 128, 128, 8
    $region5: #{tpu_custom_call.1} parent=1 // pred_fallthru
      _
    // Predicated region
    $region6: #{tpu_custom_call.1} parent=1 // pred_check
      _
    $region7: #{tpu_custom_call.1} parent=1 // pred_check_branch
      %30 = sbr.rel (0) target = $region9
    $region8: #{tpu_custom_call.1} parent=1 // pred_region
      %s32 = ssub.s32 2048, 2048
      %33 = vsyncadd [#allocation7], %s32
      %s34 = sshll.u32 [#allocation6], 4
      %s35 = int_to_ptr.vmem [resolvable:$true] %s34
      %40 = dma.hbm_to_vmem [thread:$0]  %s1, 2048, %s35, [#allocation7], 128, 128, 8
    $region9: #{tpu_custom_call.1} parent=1 // pred_fallthru
      _
    // Predicated region
    $region10: #{tpu_custom_call.1} parent=1 // pred_check
      _
    $region11: #{tpu_custom_call.1} parent=1 // pred_check_branch
      %42 = sbr.rel (0) target = $region13
    $region12: #{tpu_custom_call.1} parent=1 // pred_region
      %s44 = ssub.s32 2048, 2048
      %45 = vsyncadd [#allocation7], %s44
      %s46 = sshll.u32 [#allocation8], 4
      %s47 = int_to_ptr.vmem [resolvable:$true] %s46
      %52 = dma.hbm_to_vmem [thread:$0]  %s2, 2048, %s47, [#allocation7], 128, 128, 8
    $region13: #{tpu_custom_call.1} parent=1 // pred_fallthru
      _
    // Predicated region
    $region14: #{tpu_custom_call.1} parent=1 // pred_check
      _
    $region15: #{tpu_custom_call.1} parent=1 // pred_check_branch
      %54 = sbr.rel (0) target = $region17
    $region16: #{tpu_custom_call.1} parent=1 // pred_region
      %s56 = ssub.s32 4096, 4096
      %57 = vsyncadd [#allocation10], %s56
      %s58 = sshll.u32 [#allocation9], 4
      %s59 = int_to_ptr.vmem [resolvable:$true] %s58
      %64 = dma.hbm_to_vmem [thread:$0]  %s3, 4096, %s59, [#allocation10], 128, 128, 8
    $region17: #{tpu_custom_call.1} parent=1 // pred_fallthru
      _
    // Predicated region
    $region18: #{tpu_custom_call.1} parent=1 // pred_check
      _
    $region19: #{tpu_custom_call.1} parent=1 // pred_check_branch
      %66 = sbr.rel (0) target = $region21
    $region20: #{tpu_custom_call.1} parent=1 // pred_region
      _
    $region21: #{tpu_custom_call.1} parent=1 // pred_fallthru
      _
    // Predicated region
    $region22: #{tpu_custom_call.1} parent=1 // pred_check
      _
    $region23: #{tpu_custom_call.1} parent=1 // pred_check_branch
      %68 = sbr.rel (0) target = $region25
    $region24: #{tpu_custom_call.1} parent=1 // pred_region
      %69 = dma.done [#allocation4], 1024
    $region25: #{tpu_custom_call.1} parent=1 // pred_fallthru
      _
    // Predicated region
    $region26: #{tpu_custom_call.1} parent=1 // pred_check
      _
    $region27: #{tpu_custom_call.1} parent=1 // pred_check_branch
      %71 = sbr.rel (0) target = $region29
    $region28: #{tpu_custom_call.1} parent=1 // pred_region
      %72 = dma.done [#allocation7], 2048
    $region29: #{tpu_custom_call.1} parent=1 // pred_fallthru
      _
    // Predicated region
    $region30: #{tpu_custom_call.1} parent=1 // pred_check
      _
    $region31: #{tpu_custom_call.1} parent=1 // pred_check_branch
      %74 = sbr.rel (0) target = $region33
    $region32: #{tpu_custom_call.1} parent=1 // pred_region
      %75 = dma.done [#allocation7], 2048
    $region33: #{tpu_custom_call.1} parent=1 // pred_fallthru
      _
    // Predicated region
    $region34: #{tpu_custom_call.1} parent=1 // pred_check
      _
    $region35: #{tpu_custom_call.1} parent=1 // pred_check_branch
      %77 = sbr.rel (0) target = $region37
    $region36: #{tpu_custom_call.1} parent=1 // pred_region
      %78 = dma.done [#allocation10], 4096
    $region37: #{tpu_custom_call.1} parent=1 // pred_fallthru
      _
    %p79 = scmp.eq.s32.totalorder 0, 0
    // Predicated region
    $region38: #{tpu_custom_call.1} parent=1 // pred_check
      %p80 = pneg %p79
    $region39: #{tpu_custom_call.1} parent=1 // pred_check_branch
      %82 = sbr.rel (%p80) target = $region41
    $region40: #{tpu_custom_call.1} parent=1 // pred_region
      %83 = vst [vmem:[#allocation2] sm:$0xff] 0.0
      %84 = vst [vmem:[#allocation2 + $0x8] sm:$0xff] 0.0
    $region41: #{tpu_custom_call.1} parent=1 // pred_fallthru
      _
    %v85 = vld [vmem:[#allocation3] sm:$0xff]
    %v86 = vld [vmem:[#allocation3 + $0x8] sm:$0xff]
    %v87 = vld [vmem:[#allocation3 + $0x10] sm:$0xff]
    %v88 = vld [vmem:[#allocation3 + $0x18] sm:$0xff]
    %v89 = vld [vmem:[#allocation3 + $0x20] sm:$0xff]
    %v90 = vld [vmem:[#allocation3 + $0x28] sm:$0xff]
    %v91 = vld [vmem:[#allocation3 + $0x30] sm:$0xff]
    %v92 = vld [vmem:[#allocation3 + $0x38] sm:$0xff]
    %v93 = vld [vmem:[#allocation6] sm:$0xff]
    %v94 = vld [vmem:[#allocation6 + $0x8] sm:$0xff]
    %v95 = vld [vmem:[#allocation6 + $0x10] sm:$0xff]
    %v96 = vld [vmem:[#allocation6 + $0x18] sm:$0xff]
    %v97 = vld [vmem:[#allocation6 + $0x20] sm:$0xff]
    %v98 = vld [vmem:[#allocation6 + $0x28] sm:$0xff]
    %v99 = vld [vmem:[#allocation6 + $0x30] sm:$0xff]
    %v100 = vld [vmem:[#allocation6 + $0x38] sm:$0xff]
    %v101 = vld [vmem:[#allocation6 + $0x40] sm:$0xff]
    %v102 = vld [vmem:[#allocation6 + $0x48] sm:$0xff]
    %v103 = vld [vmem:[#allocation6 + $0x50] sm:$0xff]
    %v104 = vld [vmem:[#allocation6 + $0x58] sm:$0xff]
    %v105 = vld [vmem:[#allocation6 + $0x60] sm:$0xff]
    %v106 = vld [vmem:[#allocation6 + $0x68] sm:$0xff]
    %v107 = vld [vmem:[#allocation6 + $0x70] sm:$0xff]
    %v108 = vld [vmem:[#allocation6 + $0x78] sm:$0xff]
    %v109 = vld [vmem:[%s4] sm:$0x1]
    %v111 = vlaneseq
    %v112 = vshrl.u32 %v111, 7
    %v113 = vsub.s32 0, %v112
    %v114 = vrot.slane %v109, %v113
    %116 = vmatprep.subr.mxu0 0.0
    %117 = vmatpush1.msra.mxu0 %v93
    %118 = vmatprep.subr.mxu0 0.0
    %119 = vmatpush1.msra.mxu0 %v94
    %120 = vmatprep.subr.mxu0 0.0
    %121 = vmatpush1.msra.mxu0 %v95
    %122 = vmatprep.subr.mxu0 0.0
    %123 = vmatpush1.msra.mxu0 %v96
    %124 = vmatprep.subr.mxu0 0.0
    %125 = vmatpush1.msra.mxu0 %v97
    %126 = vmatprep.subr.mxu0 0.0
    %127 = vmatpush1.msra.mxu0 %v98
    %128 = vmatprep.subr.mxu0 0.0
    %129 = vmatpush1.msra.mxu0 %v99
    %130 = vmatprep.subr.mxu0 0.0
    %131 = vmatpush1.msra.mxu0 %v100
    %132 = vmatprep.subr.mxu0 0.0
    %133 = vmatpush1.msra.mxu0 %v101
    %134 = vmatprep.subr.mxu0 0.0
    %135 = vmatpush1.msra.mxu0 %v102
    %136 = vmatprep.subr.mxu0 0.0
    %137 = vmatpush1.msra.mxu0 %v103
    %138 = vmatprep.subr.mxu0 0.0
    %139 = vmatpush1.msra.mxu0 %v104
    %140 = vmatprep.subr.mxu0 0.0
    %141 = vmatpush1.msra.mxu0 %v105
    %142 = vmatprep.subr.mxu0 0.0
    %143 = vmatpush1.msra.mxu0 %v106
    %144 = vmatprep.subr.mxu0 0.0
    %145 = vmatpush1.msra.mxu0 %v107
    %146 = vmatprep.subr.mxu0 0.0
    %147 = vmatpush1.msra.mxu0 %v108
    %148 = vmatprep.subr.mxu0 0.0
    %149 = vmatpush1.msra.mxu0 0.0
    %150 = vmatprep.subr.mxu0 0.0
    %151 = vmatpush1.msra.mxu0 0.0
    %152 = vmatprep.subr.mxu0 0.0
    %153 = vmatpush1.msra.mxu0 0.0
    %154 = vmatprep.subr.mxu0 0.0
    %155 = vmatpush1.msra.mxu0 0.0
    %156 = vmatprep.subr.mxu0 0.0
    %157 = vmatpush1.msra.mxu0 0.0
    %158 = vmatprep.subr.mxu0 0.0
    %159 = vmatpush1.msra.mxu0 0.0
    %160 = vmatprep.subr.mxu0 0.0
    %161 = vmatpush1.msra.mxu0 0.0
    %162 = vmatprep.subr.mxu0 0.0
    %163 = vmatpush1.msra.mxu0 0.0
    %164 = vmatprep.subr.mxu0 0.0
    %165 = vmatpush1.msra.mxu0 0.0
    %166 = vmatprep.subr.mxu0 0.0
    %167 = vmatpush1.msra.mxu0 0.0
    %168 = vmatprep.subr.mxu0 0.0
    %169 = vmatpush1.msra.mxu0 0.0
    %170 = vmatprep.subr.mxu0 0.0
    %171 = vmatpush1.msra.mxu0 0.0
    %172 = vmatprep.subr.mxu0 0.0
    %173 = vmatpush1.msra.mxu0 0.0
    %174 = vmatprep.subr.mxu0 0.0
    %175 = vmatpush1.msra.mxu0 0.0
    %176 = vmatprep.subr.mxu0 0.0
    %177 = vmatpush1.msra.mxu0 0.0
    %178 = vmatprep.subr.mxu0 0.0
    %179 = vmatpush1.msra.mxu0 0.0
    %180 = vmatprep.mubr.f32.mxu0 0.0
    %181 = vmatmul.mubr.f32.gmra.mrb[0].mxu0 %v85
    %v182 = vpop.f32.mrb[0].mxu0
    %v183 = vadd.f32 %v114, %v182
    %v184 = vpop.f32.mrb[0].mxu0
    %185 = vmatprep.mubr.f32.mxu0 0.0
    %186 = vmatmul.mubr.f32.gmra.mrb[0].mxu0 %v86
    %v187 = vpop.f32.mrb[0].mxu0
    %v188 = vadd.f32 %v114, %v187
    %v189 = vpop.f32.mrb[0].mxu0
    %190 = vmatprep.mubr.f32.mxu0 0.0
    %191 = vmatmul.mubr.f32.gmra.mrb[0].mxu0 %v87
    %v192 = vpop.f32.mrb[0].mxu0
    %v193 = vadd.f32 %v114, %v192
    %v194 = vpop.f32.mrb[0].mxu0
    %195 = vmatprep.mubr.f32.mxu0 0.0
    %196 = vmatmul.mubr.f32.gmra.mrb[0].mxu0 %v88
    %v197 = vpop.f32.mrb[0].mxu0
    %v198 = vadd.f32 %v114, %v197
    %v199 = vpop.f32.mrb[0].mxu0
    %200 = vmatprep.mubr.f32.mxu0 0.0
    %201 = vmatmul.mubr.f32.gmra.mrb[0].mxu0 %v89
    %v202 = vpop.f32.mrb[0].mxu0
    %v203 = vadd.f32 %v114, %v202
    %v204 = vpop.f32.mrb[0].mxu0
    %205 = vmatprep.mubr.f32.mxu0 0.0
    %206 = vmatmul.mubr.f32.gmra.mrb[0].mxu0 %v90
    %v207 = vpop.f32.mrb[0].mxu0
    %v208 = vadd.f32 %v114, %v207
    %v209 = vpop.f32.mrb[0].mxu0
    %210 = vmatprep.mubr.f32.mxu0 0.0
    %211 = vmatmul.mubr.f32.gmra.mrb[0].mxu0 %v91
    %v212 = vpop.f32.mrb[0].mxu0
    %v213 = vadd.f32 %v114, %v212
    %v214 = vpop.f32.mrb[0].mxu0
    %215 = vmatprep.mubr.f32.mxu0 0.0
    %216 = vmatmul.mubr.f32.gmra.mrb[0].mxu0 %v92
    %v217 = vpop.f32.mrb[0].mxu0
    %v218 = vadd.f32 %v114, %v217
    %v219 = vpop.f32.mrb[0].mxu0
    %220 = vdwg.mxu0
    %221 = vst [vmem:[#allocation11] sm:$0xff] %v183
    %222 = vst [vmem:[#allocation11 + $0x8] sm:$0xff] %v188
    %223 = vst [vmem:[#allocation11 + $0x10] sm:$0xff] %v193
    %224 = vst [vmem:[#allocation11 + $0x18] sm:$0xff] %v198
    %225 = vst [vmem:[#allocation11 + $0x20] sm:$0xff] %v203
    %226 = vst [vmem:[#allocation11 + $0x28] sm:$0xff] %v208
    %227 = vst [vmem:[#allocation11 + $0x30] sm:$0xff] %v213
    %228 = vst [vmem:[#allocation11 + $0x38] sm:$0xff] %v218
    %v229 = vld [vmem:[#allocation9] sm:$0xff]
    %v230 = vld [vmem:[#allocation9 + $0x8] sm:$0xff]
    %v231 = vld [vmem:[#allocation9 + $0x10] sm:$0xff]
    %v232 = vld [vmem:[#allocation9 + $0x18] sm:$0xff]
    %v233 = vld [vmem:[#allocation9 + $0x20] sm:$0xff]
    %v234 = vld [vmem:[#allocation9 + $0x28] sm:$0xff]
    %v235 = vld [vmem:[#allocation9 + $0x30] sm:$0xff]
    %v236 = vld [vmem:[#allocation9 + $0x38] sm:$0xff]
    %v237 = vld [vmem:[#allocation9 + $0x40] sm:$0xff]
    %v238 = vld [vmem:[#allocation9 + $0x48] sm:$0xff]
    %v239 = vld [vmem:[#allocation9 + $0x50] sm:$0xff]
    %v240 = vld [vmem:[#allocation9 + $0x58] sm:$0xff]
    %v241 = vld [vmem:[#allocation9 + $0x60] sm:$0xff]
    %v242 = vld [vmem:[#allocation9 + $0x68] sm:$0xff]
    %v243 = vld [vmem:[#allocation9 + $0x70] sm:$0xff]
    %v244 = vld [vmem:[#allocation9 + $0x78] sm:$0xff]
    %v245 = vld [vmem:[#allocation2] sm:$0xff]
    %v246 = vld [vmem:[#allocation11] sm:$0xff]
    %247 = vmatprep.subr.mxu0 0.0
    %248 = vmatpush1.msra.mxu0 %v229
    %249 = vmatprep.subr.mxu0 0.0
    %250 = vmatpush1.msra.mxu0 %v230
    %251 = vmatprep.subr.mxu0 0.0
    %252 = vmatpush1.msra.mxu0 %v231
    %253 = vmatprep.subr.mxu0 0.0
    %254 = vmatpush1.msra.mxu0 %v232
    %255 = vmatprep.subr.mxu0 0.0
    %256 = vmatpush1.msra.mxu0 %v233
    %257 = vmatprep.subr.mxu0 0.0
    %258 = vmatpush1.msra.mxu0 %v234
    %259 = vmatprep.subr.mxu0 0.0
    %260 = vmatpush1.msra.mxu0 %v235
    %261 = vmatprep.subr.mxu0 0.0
    %262 = vmatpush1.msra.mxu0 %v236
    %263 = vmatprep.subr.mxu0 0.0
    %264 = vmatpush1.msra.mxu0 %v237
    %265 = vmatprep.subr.mxu0 0.0
    %266 = vmatpush1.msra.mxu0 %v238
    %267 = vmatprep.subr.mxu0 0.0
    %268 = vmatpush1.msra.mxu0 %v239
    %269 = vmatprep.subr.mxu0 0.0
    %270 = vmatpush1.msra.mxu0 %v240
    %271 = vmatprep.subr.mxu0 0.0
    %272 = vmatpush1.msra.mxu0 %v241
    %273 = vmatprep.subr.mxu0 0.0
    %274 = vmatpush1.msra.mxu0 %v242
    %275 = vmatprep.subr.mxu0 0.0
    %276 = vmatpush1.msra.mxu0 %v243
    %277 = vmatprep.subr.mxu0 0.0
    %278 = vmatpush1.msra.mxu0 %v244
    %279 = vmatprep.subr.mxu0 0.0
    %280 = vmatpush1.msra.mxu0 0.0
    %281 = vmatprep.subr.mxu0 0.0
    %282 = vmatpush1.msra.mxu0 0.0
    %283 = vmatprep.subr.mxu0 0.0
    %284 = vmatpush1.msra.mxu0 0.0
    %285 = vmatprep.subr.mxu0 0.0
    %286 = vmatpush1.msra.mxu0 0.0
    %287 = vmatprep.subr.mxu0 0.0
    %288 = vmatpush1.msra.mxu0 0.0
    %289 = vmatprep.subr.mxu0 0.0
    %290 = vmatpush1.msra.mxu0 0.0
    %291 = vmatprep.subr.mxu0 0.0
    %292 = vmatpush1.msra.mxu0 0.0
    %293 = vmatprep.subr.mxu0 0.0
    %294 = vmatpush1.msra.mxu0 0.0
    %295 = vmatprep.subr.mxu0 0.0
    %296 = vmatpush1.msra.mxu0 0.0
    %297 = vmatprep.subr.mxu0 0.0
    %298 = vmatpush1.msra.mxu0 0.0
    %299 = vmatprep.subr.mxu0 0.0
    %300 = vmatpush1.msra.mxu0 0.0
    %301 = vmatprep.subr.mxu0 0.0
    %302 = vmatpush1.msra.mxu0 0.0
    %303 = vmatprep.subr.mxu0 0.0
    %304 = vmatpush1.msra.mxu0 0.0
    %305 = vmatprep.subr.mxu0 0.0
    %306 = vmatpush1.msra.mxu0 0.0
    %307 = vmatprep.subr.mxu0 0.0
    %308 = vmatpush1.msra.mxu0 0.0
    %309 = vmatprep.subr.mxu0 0.0
    %310 = vmatpush1.msra.mxu0 0.0
    %311 = vmatprep.mubr.f32.mxu0 0.0
    %312 = vmatmul.mubr.f32.gmra.mrb[0].mxu0 %v245
    %v313 = vpop.f32.mrb[0].mxu0
    %v314 = vadd.f32 0.0, %v313
    %v315 = vpop.f32.mrb[0].mxu0
    %316 = vdwg.mxu0
    %v317 = vadd.f32 %v246, %v314
    %v318 = vtanh.pop %v317
    %319 = vst [vmem:[#allocation11] sm:$0xff] %v318
    %s320 = scalar_lea.vmem [#allocation11], 8
    %v321 = vld [vmem:[%s320] sm:$0xff]
    %322 = vmatprep.subr.mxu0 0.0
    %323 = vmatpush1.msra.mxu0 %v229
    %324 = vmatprep.subr.mxu0 0.0
    %325 = vmatpush1.msra.mxu0 %v230
    %326 = vmatprep.subr.mxu0 0.0
    %327 = vmatpush1.msra.mxu0 %v231
    %328 = vmatprep.subr.mxu0 0.0
    %329 = vmatpush1.msra.mxu0 %v232
    %330 = vmatprep.subr.mxu0 0.0
    %331 = vmatpush1.msra.mxu0 %v233
    %332 = vmatprep.subr.mxu0 0.0
    %333 = vmatpush1.msra.mxu0 %v234
    %334 = vmatprep.subr.mxu0 0.0
    %335 = vmatpush1.msra.mxu0 %v235
    %336 = vmatprep.subr.mxu0 0.0
    %337 = vmatpush1.msra.mxu0 %v236
    %338 = vmatprep.subr.mxu0 0.0
    %339 = vmatpush1.msra.mxu0 %v237
    %340 = vmatprep.subr.mxu0 0.0
    %341 = vmatpush1.msra.mxu0 %v238
    %342 = vmatprep.subr.mxu0 0.0
    %343 = vmatpush1.msra.mxu0 %v239
    %344 = vmatprep.subr.mxu0 0.0
    %345 = vmatpush1.msra.mxu0 %v240
    %346 = vmatprep.subr.mxu0 0.0
    %347 = vmatpush1.msra.mxu0 %v241
    %348 = vmatprep.subr.mxu0 0.0
    %349 = vmatpush1.msra.mxu0 %v242
    %350 = vmatprep.subr.mxu0 0.0
    %351 = vmatpush1.msra.mxu0 %v243
    %352 = vmatprep.subr.mxu0 0.0
    %353 = vmatpush1.msra.mxu0 %v244
    %354 = vmatprep.subr.mxu0 0.0
    %355 = vmatpush1.msra.mxu0 0.0
    %356 = vmatprep.subr.mxu0 0.0
    %357 = vmatpush1.msra.mxu0 0.0
    %358 = vmatprep.subr.mxu0 0.0
    %359 = vmatpush1.msra.mxu0 0.0
    %360 = vmatprep.subr.mxu0 0.0
    %361 = vmatpush1.msra.mxu0 0.0
    %362 = vmatprep.subr.mxu0 0.0
    %363 = vmatpush1.msra.mxu0 0.0
    %364 = vmatprep.subr.mxu0 0.0
    %365 = vmatpush1.msra.mxu0 0.0
    %366 = vmatprep.subr.mxu0 0.0
    %367 = vmatpush1.msra.mxu0 0.0
    %368 = vmatprep.subr.mxu0 0.0
    %369 = vmatpush1.msra.mxu0 0.0
    %370 = vmatprep.subr.mxu0 0.0
    %371 = vmatpush1.msra.mxu0 0.0
    %372 = vmatprep.subr.mxu0 0.0
    %373 = vmatpush1.msra.mxu0 0.0
    %374 = vmatprep.subr.mxu0 0.0
    %375 = vmatpush1.msra.mxu0 0.0
    %376 = vmatprep.subr.mxu0 0.0
    %377 = vmatpush1.msra.mxu0 0.0
    %378 = vmatprep.subr.mxu0 0.0
    %379 = vmatpush1.msra.mxu0 0.0
    %380 = vmatprep.subr.mxu0 0.0
    %381 = vmatpush1.msra.mxu0 0.0
    %382 = vmatprep.subr.mxu0 0.0
    %383 = vmatpush1.msra.mxu0 0.0
    %384 = vmatprep.subr.mxu0 0.0
    %385 = vmatpush1.msra.mxu0 0.0
    %386 = vmatprep.mubr.f32.mxu0 0.0
    %387 = vmatmul.mubr.f32.gmra.mrb[0].mxu0 %v318
    %v388 = vpop.f32.mrb[0].mxu0
    %v389 = vadd.f32 0.0, %v388
    %v390 = vpop.f32.mrb[0].mxu0
    %391 = vdwg.mxu0
    %v392 = vadd.f32 %v321, %v389
    %v393 = vtanh.pop %v392
    %394 = vst [vmem:[%s320] sm:$0xff] %v393
    %s395 = scalar_lea.vmem [#allocation11], 16
    %v396 = vld [vmem:[%s395] sm:$0xff]
    %397 = vmatprep.subr.mxu0 0.0
    %398 = vmatpush1.msra.mxu0 %v229
    %399 = vmatprep.subr.mxu0 0.0
    %400 = vmatpush1.msra.mxu0 %v230
    %401 = vmatprep.subr.mxu0 0.0
    %402 = vmatpush1.msra.mxu0 %v231
    %403 = vmatprep.subr.mxu0 0.0
    %404 = vmatpush1.msra.mxu0 %v232
    %405 = vmatprep.subr.mxu0 0.0
    %406 = vmatpush1.msra.mxu0 %v233
    %407 = vmatprep.subr.mxu0 0.0
    %408 = vmatpush1.msra.mxu0 %v234
    %409 = vmatprep.subr.mxu0 0.0
    %410 = vmatpush1.msra.mxu0 %v235
    %411 = vmatprep.subr.mxu0 0.0
    %412 = vmatpush1.msra.mxu0 %v236
    %413 = vmatprep.subr.mxu0 0.0
    %414 = vmatpush1.msra.mxu0 %v237
    %415 = vmatprep.subr.mxu0 0.0
    %416 = vmatpush1.msra.mxu0 %v238
    %417 = vmatprep.subr.mxu0 0.0
    %418 = vmatpush1.msra.mxu0 %v239
    %419 = vmatprep.subr.mxu0 0.0
    %420 = vmatpush1.msra.mxu0 %v240
    %421 = vmatprep.subr.mxu0 0.0
    %422 = vmatpush1.msra.mxu0 %v241
    %423 = vmatprep.subr.mxu0 0.0
    %424 = vmatpush1.msra.mxu0 %v242
    %425 = vmatprep.subr.mxu0 0.0
    %426 = vmatpush1.msra.mxu0 %v243
    %427 = vmatprep.subr.mxu0 0.0
    %428 = vmatpush1.msra.mxu0 %v244
    %429 = vmatprep.subr.mxu0 0.0
    %430 = vmatpush1.msra.mxu0 0.0
    %431 = vmatprep.subr.mxu0 0.0
    %432 = vmatpush1.msra.mxu0 0.0
    %433 = vmatprep.subr.mxu0 0.0
    %434 = vmatpush1.msra.mxu0 0.0
    %435 = vmatprep.subr.mxu0 0.0
    %436 = vmatpush1.msra.mxu0 0.0
    %437 = vmatprep.subr.mxu0 0.0
    %438 = vmatpush1.msra.mxu0 0.0
    %439 = vmatprep.subr.mxu0 0.0
    %440 = vmatpush1.msra.mxu0 0.0
    %441 = vmatprep.subr.mxu0 0.0
    %442 = vmatpush1.msra.mxu0 0.0
    %443 = vmatprep.subr.mxu0 0.0
    %444 = vmatpush1.msra.mxu0 0.0
    %445 = vmatprep.subr.mxu0 0.0
    %446 = vmatpush1.msra.mxu0 0.0
    %447 = vmatprep.subr.mxu0 0.0
    %448 = vmatpush1.msra.mxu0 0.0
    %449 = vmatprep.subr.mxu0 0.0
    %450 = vmatpush1.msra.mxu0 0.0
    %451 = vmatprep.subr.mxu0 0.0
    %452 = vmatpush1.msra.mxu0 0.0
    %453 = vmatprep.subr.mxu0 0.0
    %454 = vmatpush1.msra.mxu0 0.0
    %455 = vmatprep.subr.mxu0 0.0
    %456 = vmatpush1.msra.mxu0 0.0
    %457 = vmatprep.subr.mxu0 0.0
    %458 = vmatpush1.msra.mxu0 0.0
    %459 = vmatprep.subr.mxu0 0.0
    %460 = vmatpush1.msra.mxu0 0.0
    %461 = vmatprep.mubr.f32.mxu0 0.0
    %462 = vmatmul.mubr.f32.gmra.mrb[0].mxu0 %v393
    %v463 = vpop.f32.mrb[0].mxu0
    %v464 = vadd.f32 0.0, %v463
    %v465 = vpop.f32.mrb[0].mxu0
    %466 = vdwg.mxu0
    %v467 = vadd.f32 %v396, %v464
    %v468 = vtanh.pop %v467
    %469 = vst [vmem:[%s395] sm:$0xff] %v468
    %s470 = scalar_lea.vmem [#allocation11], 24
    %v471 = vld [vmem:[%s470] sm:$0xff]
    %472 = vmatprep.subr.mxu0 0.0
    %473 = vmatpush1.msra.mxu0 %v229
    %474 = vmatprep.subr.mxu0 0.0
    %475 = vmatpush1.msra.mxu0 %v230
    %476 = vmatprep.subr.mxu0 0.0
    %477 = vmatpush1.msra.mxu0 %v231
    %478 = vmatprep.subr.mxu0 0.0
    %479 = vmatpush1.msra.mxu0 %v232
    %480 = vmatprep.subr.mxu0 0.0
    %481 = vmatpush1.msra.mxu0 %v233
    %482 = vmatprep.subr.mxu0 0.0
    %483 = vmatpush1.msra.mxu0 %v234
    %484 = vmatprep.subr.mxu0 0.0
    %485 = vmatpush1.msra.mxu0 %v235
    %486 = vmatprep.subr.mxu0 0.0
    %487 = vmatpush1.msra.mxu0 %v236
    %488 = vmatprep.subr.mxu0 0.0
    %489 = vmatpush1.msra.mxu0 %v237
    %490 = vmatprep.subr.mxu0 0.0
    %491 = vmatpush1.msra.mxu0 %v238
    %492 = vmatprep.subr.mxu0 0.0
    %493 = vmatpush1.msra.mxu0 %v239
    %494 = vmatprep.subr.mxu0 0.0
    %495 = vmatpush1.msra.mxu0 %v240
    %496 = vmatprep.subr.mxu0 0.0
    %497 = vmatpush1.msra.mxu0 %v241
    %498 = vmatprep.subr.mxu0 0.0
    %499 = vmatpush1.msra.mxu0 %v242
    %500 = vmatprep.subr.mxu0 0.0
    %501 = vmatpush1.msra.mxu0 %v243
    %502 = vmatprep.subr.mxu0 0.0
    %503 = vmatpush1.msra.mxu0 %v244
    %504 = vmatprep.subr.mxu0 0.0
    %505 = vmatpush1.msra.mxu0 0.0
    %506 = vmatprep.subr.mxu0 0.0
    %507 = vmatpush1.msra.mxu0 0.0
    %508 = vmatprep.subr.mxu0 0.0
    %509 = vmatpush1.msra.mxu0 0.0
    %510 = vmatprep.subr.mxu0 0.0
    %511 = vmatpush1.msra.mxu0 0.0
    %512 = vmatprep.subr.mxu0 0.0
    %513 = vmatpush1.msra.mxu0 0.0
    %514 = vmatprep.subr.mxu0 0.0
    %515 = vmatpush1.msra.mxu0 0.0
    %516 = vmatprep.subr.mxu0 0.0
    %517 = vmatpush1.msra.mxu0 0.0
    %518 = vmatprep.subr.mxu0 0.0
    %519 = vmatpush1.msra.mxu0 0.0
    %520 = vmatprep.subr.mxu0 0.0
    %521 = vmatpush1.msra.mxu0 0.0
    %522 = vmatprep.subr.mxu0 0.0
    %523 = vmatpush1.msra.mxu0 0.0
    %524 = vmatprep.subr.mxu0 0.0
    %525 = vmatpush1.msra.mxu0 0.0
    %526 = vmatprep.subr.mxu0 0.0
    %527 = vmatpush1.msra.mxu0 0.0
    %528 = vmatprep.subr.mxu0 0.0
    %529 = vmatpush1.msra.mxu0 0.0
    %530 = vmatprep.subr.mxu0 0.0
    %531 = vmatpush1.msra.mxu0 0.0
    %532 = vmatprep.subr.mxu0 0.0
    %533 = vmatpush1.msra.mxu0 0.0
    %534 = vmatprep.subr.mxu0 0.0
    %535 = vmatpush1.msra.mxu0 0.0
    %536 = vmatprep.mubr.f32.mxu0 0.0
    %537 = vmatmul.mubr.f32.gmra.mrb[0].mxu0 %v468
    %v538 = vpop.f32.mrb[0].mxu0
    %v539 = vadd.f32 0.0, %v538
    %v540 = vpop.f32.mrb[0].mxu0
    %541 = vdwg.mxu0
    %v542 = vadd.f32 %v471, %v539
    %v543 = vtanh.pop %v542
    %544 = vst [vmem:[%s470] sm:$0xff] %v543
    %s545 = scalar_lea.vmem [#allocation11], 32
    %v546 = vld [vmem:[%s545] sm:$0xff]
    %547 = vmatprep.subr.mxu0 0.0
    %548 = vmatpush1.msra.mxu0 %v229
    %549 = vmatprep.subr.mxu0 0.0
    %550 = vmatpush1.msra.mxu0 %v230
    %551 = vmatprep.subr.mxu0 0.0
    %552 = vmatpush1.msra.mxu0 %v231
    %553 = vmatprep.subr.mxu0 0.0
    %554 = vmatpush1.msra.mxu0 %v232
    %555 = vmatprep.subr.mxu0 0.0
    %556 = vmatpush1.msra.mxu0 %v233
    %557 = vmatprep.subr.mxu0 0.0
    %558 = vmatpush1.msra.mxu0 %v234
    %559 = vmatprep.subr.mxu0 0.0
    %560 = vmatpush1.msra.mxu0 %v235
    %561 = vmatprep.subr.mxu0 0.0
    %562 = vmatpush1.msra.mxu0 %v236
    %563 = vmatprep.subr.mxu0 0.0
    %564 = vmatpush1.msra.mxu0 %v237
    %565 = vmatprep.subr.mxu0 0.0
    %566 = vmatpush1.msra.mxu0 %v238
    %567 = vmatprep.subr.mxu0 0.0
    %568 = vmatpush1.msra.mxu0 %v239
    %569 = vmatprep.subr.mxu0 0.0
    %570 = vmatpush1.msra.mxu0 %v240
    %571 = vmatprep.subr.mxu0 0.0
    %572 = vmatpush1.msra.mxu0 %v241
    %573 = vmatprep.subr.mxu0 0.0
    %574 = vmatpush1.msra.mxu0 %v242
    %575 = vmatprep.subr.mxu0 0.0
    %576 = vmatpush1.msra.mxu0 %v243
    %577 = vmatprep.subr.mxu0 0.0
    %578 = vmatpush1.msra.mxu0 %v244
    %579 = vmatprep.subr.mxu0 0.0
    %580 = vmatpush1.msra.mxu0 0.0
    %581 = vmatprep.subr.mxu0 0.0
    %582 = vmatpush1.msra.mxu0 0.0
    %583 = vmatprep.subr.mxu0 0.0
    %584 = vmatpush1.msra.mxu0 0.0
    %585 = vmatprep.subr.mxu0 0.0
    %586 = vmatpush1.msra.mxu0 0.0
    %587 = vmatprep.subr.mxu0 0.0
    %588 = vmatpush1.msra.mxu0 0.0
    %589 = vmatprep.subr.mxu0 0.0
    %590 = vmatpush1.msra.mxu0 0.0
    %591 = vmatprep.subr.mxu0 0.0
    %592 = vmatpush1.msra.mxu0 0.0
    %593 = vmatprep.subr.mxu0 0.0
    %594 = vmatpush1.msra.mxu0 0.0
    %595 = vmatprep.subr.mxu0 0.0
    %596 = vmatpush1.msra.mxu0 0.0
    %597 = vmatprep.subr.mxu0 0.0
    %598 = vmatpush1.msra.mxu0 0.0
    %599 = vmatprep.subr.mxu0 0.0
    %600 = vmatpush1.msra.mxu0 0.0
    %601 = vmatprep.subr.mxu0 0.0
    %602 = vmatpush1.msra.mxu0 0.0
    %603 = vmatprep.subr.mxu0 0.0
    %604 = vmatpush1.msra.mxu0 0.0
    %605 = vmatprep.subr.mxu0 0.0
    %606 = vmatpush1.msra.mxu0 0.0
    %607 = vmatprep.subr.mxu0 0.0
    %608 = vmatpush1.msra.mxu0 0.0
    %609 = vmatprep.subr.mxu0 0.0
    %610 = vmatpush1.msra.mxu0 0.0
    %611 = vmatprep.mubr.f32.mxu0 0.0
    %612 = vmatmul.mubr.f32.gmra.mrb[0].mxu0 %v543
    %v613 = vpop.f32.mrb[0].mxu0
    %v614 = vadd.f32 0.0, %v613
    %v615 = vpop.f32.mrb[0].mxu0
    %616 = vdwg.mxu0
    %v617 = vadd.f32 %v546, %v614
    %v618 = vtanh.pop %v617
    %619 = vst [vmem:[%s545] sm:$0xff] %v618
    %s620 = scalar_lea.vmem [#allocation11], 40
    %v621 = vld [vmem:[%s620] sm:$0xff]
    %622 = vmatprep.subr.mxu0 0.0
    %623 = vmatpush1.msra.mxu0 %v229
    %624 = vmatprep.subr.mxu0 0.0
    %625 = vmatpush1.msra.mxu0 %v230
    %626 = vmatprep.subr.mxu0 0.0
    %627 = vmatpush1.msra.mxu0 %v231
    %628 = vmatprep.subr.mxu0 0.0
    %629 = vmatpush1.msra.mxu0 %v232
    %630 = vmatprep.subr.mxu0 0.0
    %631 = vmatpush1.msra.mxu0 %v233
    %632 = vmatprep.subr.mxu0 0.0
    %633 = vmatpush1.msra.mxu0 %v234
    %634 = vmatprep.subr.mxu0 0.0
    %635 = vmatpush1.msra.mxu0 %v235
    %636 = vmatprep.subr.mxu0 0.0
    %637 = vmatpush1.msra.mxu0 %v236
    %638 = vmatprep.subr.mxu0 0.0
    %639 = vmatpush1.msra.mxu0 %v237
    %640 = vmatprep.subr.mxu0 0.0
    %641 = vmatpush1.msra.mxu0 %v238
    %642 = vmatprep.subr.mxu0 0.0
    %643 = vmatpush1.msra.mxu0 %v239
    %644 = vmatprep.subr.mxu0 0.0
    %645 = vmatpush1.msra.mxu0 %v240
    %646 = vmatprep.subr.mxu0 0.0
    %647 = vmatpush1.msra.mxu0 %v241
    %648 = vmatprep.subr.mxu0 0.0
    %649 = vmatpush1.msra.mxu0 %v242
    %650 = vmatprep.subr.mxu0 0.0
    %651 = vmatpush1.msra.mxu0 %v243
    %652 = vmatprep.subr.mxu0 0.0
    %653 = vmatpush1.msra.mxu0 %v244
    %654 = vmatprep.subr.mxu0 0.0
    %655 = vmatpush1.msra.mxu0 0.0
    %656 = vmatprep.subr.mxu0 0.0
    %657 = vmatpush1.msra.mxu0 0.0
    %658 = vmatprep.subr.mxu0 0.0
    %659 = vmatpush1.msra.mxu0 0.0
    %660 = vmatprep.subr.mxu0 0.0
    %661 = vmatpush1.msra.mxu0 0.0
    %662 = vmatprep.subr.mxu0 0.0
    %663 = vmatpush1.msra.mxu0 0.0
    %664 = vmatprep.subr.mxu0 0.0
    %665 = vmatpush1.msra.mxu0 0.0
    %666 = vmatprep.subr.mxu0 0.0
    %667 = vmatpush1.msra.mxu0 0.0
    %668 = vmatprep.subr.mxu0 0.0
    %669 = vmatpush1.msra.mxu0 0.0
    %670 = vmatprep.subr.mxu0 0.0
    %671 = vmatpush1.msra.mxu0 0.0
    %672 = vmatprep.subr.mxu0 0.0
    %673 = vmatpush1.msra.mxu0 0.0
    %674 = vmatprep.subr.mxu0 0.0
    %675 = vmatpush1.msra.mxu0 0.0
    %676 = vmatprep.subr.mxu0 0.0
    %677 = vmatpush1.msra.mxu0 0.0
    %678 = vmatprep.subr.mxu0 0.0
    %679 = vmatpush1.msra.mxu0 0.0
    %680 = vmatprep.subr.mxu0 0.0
    %681 = vmatpush1.msra.mxu0 0.0
    %682 = vmatprep.subr.mxu0 0.0
    %683 = vmatpush1.msra.mxu0 0.0
    %684 = vmatprep.subr.mxu0 0.0
    %685 = vmatpush1.msra.mxu0 0.0
    %686 = vmatprep.mubr.f32.mxu0 0.0
    %687 = vmatmul.mubr.f32.gmra.mrb[0].mxu0 %v618
    %v688 = vpop.f32.mrb[0].mxu0
    %v689 = vadd.f32 0.0, %v688
    %v690 = vpop.f32.mrb[0].mxu0
    %691 = vdwg.mxu0
    %v692 = vadd.f32 %v621, %v689
    %v693 = vtanh.pop %v692
    %694 = vst [vmem:[%s620] sm:$0xff] %v693
    %s695 = scalar_lea.vmem [#allocation11], 48
    %v696 = vld [vmem:[%s695] sm:$0xff]
    %697 = vmatprep.subr.mxu0 0.0
    %698 = vmatpush1.msra.mxu0 %v229
    %699 = vmatprep.subr.mxu0 0.0
    %700 = vmatpush1.msra.mxu0 %v230
    %701 = vmatprep.subr.mxu0 0.0
    %702 = vmatpush1.msra.mxu0 %v231
    %703 = vmatprep.subr.mxu0 0.0
    %704 = vmatpush1.msra.mxu0 %v232
    %705 = vmatprep.subr.mxu0 0.0
    %706 = vmatpush1.msra.mxu0 %v233
    %707 = vmatprep.subr.mxu0 0.0
    %708 = vmatpush1.msra.mxu0 %v234
    %709 = vmatprep.subr.mxu0 0.0
    %710 = vmatpush1.msra.mxu0 %v235
    %711 = vmatprep.subr.mxu0 0.0
    %712 = vmatpush1.msra.mxu0 %v236
    %713 = vmatprep.subr.mxu0 0.0
    %714 = vmatpush1.msra.mxu0 %v237
    %715 = vmatprep.subr.mxu0 0.0
    %716 = vmatpush1.msra.mxu0 %v238
    %717 = vmatprep.subr.mxu0 0.0
    %718 = vmatpush1.msra.mxu0 %v239
    %719 = vmatprep.subr.mxu0 0.0
    %720 = vmatpush1.msra.mxu0 %v240
    %721 = vmatprep.subr.mxu0 0.0
    %722 = vmatpush1.msra.mxu0 %v241
    %723 = vmatprep.subr.mxu0 0.0
    %724 = vmatpush1.msra.mxu0 %v242
    %725 = vmatprep.subr.mxu0 0.0
    %726 = vmatpush1.msra.mxu0 %v243
    %727 = vmatprep.subr.mxu0 0.0
    %728 = vmatpush1.msra.mxu0 %v244
    %729 = vmatprep.subr.mxu0 0.0
    %730 = vmatpush1.msra.mxu0 0.0
    %731 = vmatprep.subr.mxu0 0.0
    %732 = vmatpush1.msra.mxu0 0.0
    %733 = vmatprep.subr.mxu0 0.0
    %734 = vmatpush1.msra.mxu0 0.0
    %735 = vmatprep.subr.mxu0 0.0
    %736 = vmatpush1.msra.mxu0 0.0
    %737 = vmatprep.subr.mxu0 0.0
    %738 = vmatpush1.msra.mxu0 0.0
    %739 = vmatprep.subr.mxu0 0.0
    %740 = vmatpush1.msra.mxu0 0.0
    %741 = vmatprep.subr.mxu0 0.0
    %742 = vmatpush1.msra.mxu0 0.0
    %743 = vmatprep.subr.mxu0 0.0
    %744 = vmatpush1.msra.mxu0 0.0
    %745 = vmatprep.subr.mxu0 0.0
    %746 = vmatpush1.msra.mxu0 0.0
    %747 = vmatprep.subr.mxu0 0.0
    %748 = vmatpush1.msra.mxu0 0.0
    %749 = vmatprep.subr.mxu0 0.0
    %750 = vmatpush1.msra.mxu0 0.0
    %751 = vmatprep.subr.mxu0 0.0
    %752 = vmatpush1.msra.mxu0 0.0
    %753 = vmatprep.subr.mxu0 0.0
    %754 = vmatpush1.msra.mxu0 0.0
    %755 = vmatprep.subr.mxu0 0.0
    %756 = vmatpush1.msra.mxu0 0.0
    %757 = vmatprep.subr.mxu0 0.0
    %758 = vmatpush1.msra.mxu0 0.0
    %759 = vmatprep.subr.mxu0 0.0
    %760 = vmatpush1.msra.mxu0 0.0
    %761 = vmatprep.mubr.f32.mxu0 0.0
    %762 = vmatmul.mubr.f32.gmra.mrb[0].mxu0 %v693
    %v763 = vpop.f32.mrb[0].mxu0
    %v764 = vadd.f32 0.0, %v763
    %v765 = vpop.f32.mrb[0].mxu0
    %766 = vdwg.mxu0
    %v767 = vadd.f32 %v696, %v764
    %v768 = vtanh.pop %v767
    %769 = vst [vmem:[%s695] sm:$0xff] %v768
    %s770 = scalar_lea.vmem [#allocation11], 56
    %v771 = vld [vmem:[%s770] sm:$0xff]
    %772 = vmatprep.subr.mxu0 0.0
    %773 = vmatpush1.msra.mxu0 %v229
    %774 = vmatprep.subr.mxu0 0.0
    %775 = vmatpush1.msra.mxu0 %v230
    %776 = vmatprep.subr.mxu0 0.0
    %777 = vmatpush1.msra.mxu0 %v231
    %778 = vmatprep.subr.mxu0 0.0
    %779 = vmatpush1.msra.mxu0 %v232
    %780 = vmatprep.subr.mxu0 0.0
    %781 = vmatpush1.msra.mxu0 %v233
    %782 = vmatprep.subr.mxu0 0.0
    %783 = vmatpush1.msra.mxu0 %v234
    %784 = vmatprep.subr.mxu0 0.0
    %785 = vmatpush1.msra.mxu0 %v235
    %786 = vmatprep.subr.mxu0 0.0
    %787 = vmatpush1.msra.mxu0 %v236
    %788 = vmatprep.subr.mxu0 0.0
    %789 = vmatpush1.msra.mxu0 %v237
    %790 = vmatprep.subr.mxu0 0.0
    %791 = vmatpush1.msra.mxu0 %v238
    %792 = vmatprep.subr.mxu0 0.0
    %793 = vmatpush1.msra.mxu0 %v239
    %794 = vmatprep.subr.mxu0 0.0
    %795 = vmatpush1.msra.mxu0 %v240
    %796 = vmatprep.subr.mxu0 0.0
    %797 = vmatpush1.msra.mxu0 %v241
    %798 = vmatprep.subr.mxu0 0.0
    %799 = vmatpush1.msra.mxu0 %v242
    %800 = vmatprep.subr.mxu0 0.0
    %801 = vmatpush1.msra.mxu0 %v243
    %802 = vmatprep.subr.mxu0 0.0
    %803 = vmatpush1.msra.mxu0 %v244
    %804 = vmatprep.subr.mxu0 0.0
    %805 = vmatpush1.msra.mxu0 0.0
    %806 = vmatprep.subr.mxu0 0.0
    %807 = vmatpush1.msra.mxu0 0.0
    %808 = vmatprep.subr.mxu0 0.0
    %809 = vmatpush1.msra.mxu0 0.0
    %810 = vmatprep.subr.mxu0 0.0
    %811 = vmatpush1.msra.mxu0 0.0
    %812 = vmatprep.subr.mxu0 0.0
    %813 = vmatpush1.msra.mxu0 0.0
    %814 = vmatprep.subr.mxu0 0.0
    %815 = vmatpush1.msra.mxu0 0.0
    %816 = vmatprep.subr.mxu0 0.0
    %817 = vmatpush1.msra.mxu0 0.0
    %818 = vmatprep.subr.mxu0 0.0
    %819 = vmatpush1.msra.mxu0 0.0
    %820 = vmatprep.subr.mxu0 0.0
    %821 = vmatpush1.msra.mxu0 0.0
    %822 = vmatprep.subr.mxu0 0.0
    %823 = vmatpush1.msra.mxu0 0.0
    %824 = vmatprep.subr.mxu0 0.0
    %825 = vmatpush1.msra.mxu0 0.0
    %826 = vmatprep.subr.mxu0 0.0
    %827 = vmatpush1.msra.mxu0 0.0
    %828 = vmatprep.subr.mxu0 0.0
    %829 = vmatpush1.msra.mxu0 0.0
    %830 = vmatprep.subr.mxu0 0.0
    %831 = vmatpush1.msra.mxu0 0.0
    %832 = vmatprep.subr.mxu0 0.0
    %833 = vmatpush1.msra.mxu0 0.0
    %834 = vmatprep.subr.mxu0 0.0
    %835 = vmatpush1.msra.mxu0 0.0
    %836 = vmatprep.mubr.f32.mxu0 0.0
    %837 = vmatmul.mubr.f32.gmra.mrb[0].mxu0 %v768
    %v838 = vpop.f32.mrb[0].mxu0
    %v839 = vadd.f32 0.0, %v838
    %v840 = vpop.f32.mrb[0].mxu0
    %841 = vdwg.mxu0
    %v842 = vadd.f32 %v771, %v839
    %v843 = vtanh.pop %v842
    %844 = vst [vmem:[%s770] sm:$0xff] %v843
    %845 = vst [vmem:[#allocation2] sm:$0xff] %v843
    // Predicated region
    $region42: #{tpu_custom_call.1} parent=1 // pred_check
      %p846 = pneg %p79
    $region43: #{tpu_custom_call.1} parent=1 // pred_check_branch
      %848 = sbr.rel (%p846) target = $region45
    $region44: #{tpu_custom_call.1} parent=1 // pred_region
      %v849 = vld [vmem:[%s770] sm:$0xff]
      %850 = vst [vmem:[#allocation12] sm:$0xff] %v849
    $region45: #{tpu_custom_call.1} parent=1 // pred_fallthru
      _
    %v851 = vld [vmem:[#allocation11] sm:$0xff]
    %v852 = vld [vmem:[#allocation11 + $0x8] sm:$0xff]
    %v853 = vld [vmem:[#allocation11 + $0x10] sm:$0xff]
    %v854 = vld [vmem:[#allocation11 + $0x18] sm:$0xff]
    %v855 = vld [vmem:[#allocation11 + $0x20] sm:$0xff]
    %v856 = vld [vmem:[#allocation11 + $0x28] sm:$0xff]
    %v857 = vld [vmem:[#allocation11 + $0x30] sm:$0xff]
    %v858 = vld [vmem:[#allocation11 + $0x38] sm:$0xff]
    %v859 = vld [vmem:[#allocation8] sm:$0xff]
    %v860 = vld [vmem:[#allocation8 + $0x8] sm:$0xff]
    %v861 = vld [vmem:[#allocation8 + $0x10] sm:$0xff]
    %v862 = vld [vmem:[#allocation8 + $0x18] sm:$0xff]
    %v863 = vld [vmem:[#allocation8 + $0x20] sm:$0xff]
    %v864 = vld [vmem:[#allocation8 + $0x28] sm:$0xff]
    %v865 = vld [vmem:[#allocation8 + $0x30] sm:$0xff]
    %v866 = vld [vmem:[#allocation8 + $0x38] sm:$0xff]
    %v867 = vld [vmem:[#allocation8 + $0x40] sm:$0xff]
    %v868 = vld [vmem:[#allocation8 + $0x48] sm:$0xff]
    %v869 = vld [vmem:[#allocation8 + $0x50] sm:$0xff]
    %v870 = vld [vmem:[#allocation8 + $0x58] sm:$0xff]
    %v871 = vld [vmem:[#allocation8 + $0x60] sm:$0xff]
    %v872 = vld [vmem:[#allocation8 + $0x68] sm:$0xff]
    %v873 = vld [vmem:[#allocation8 + $0x70] sm:$0xff]
    %v874 = vld [vmem:[#allocation8 + $0x78] sm:$0xff]
    %s875 = scalar_lea.vmem %s4, 1
    %v876 = vld [vmem:[%s875] sm:$0x1]
    %v878 = vlaneseq
    %v879 = vshrl.u32 %v878, 7
    %v880 = vsub.s32 0, %v879
    %v881 = vrot.slane %v876, %v880
    %883 = vmatprep.subr.mxu0 0.0
    %884 = vmatpush1.msra.mxu0 %v859
    %885 = vmatprep.subr.mxu0 0.0
    %886 = vmatpush1.msra.mxu0 %v860
    %887 = vmatprep.subr.mxu0 0.0
    %888 = vmatpush1.msra.mxu0 %v861
    %889 = vmatprep.subr.mxu0 0.0
    %890 = vmatpush1.msra.mxu0 %v862
    %891 = vmatprep.subr.mxu0 0.0
    %892 = vmatpush1.msra.mxu0 %v863
    %893 = vmatprep.subr.mxu0 0.0
    %894 = vmatpush1.msra.mxu0 %v864
    %895 = vmatprep.subr.mxu0 0.0
    %896 = vmatpush1.msra.mxu0 %v865
    %897 = vmatprep.subr.mxu0 0.0
    %898 = vmatpush1.msra.mxu0 %v866
    %899 = vmatprep.subr.mxu0 0.0
    %900 = vmatpush1.msra.mxu0 %v867
    %901 = vmatprep.subr.mxu0 0.0
    %902 = vmatpush1.msra.mxu0 %v868
    %903 = vmatprep.subr.mxu0 0.0
    %904 = vmatpush1.msra.mxu0 %v869
    %905 = vmatprep.subr.mxu0 0.0
    %906 = vmatpush1.msra.mxu0 %v870
    %907 = vmatprep.subr.mxu0 0.0
    %908 = vmatpush1.msra.mxu0 %v871
    %909 = vmatprep.subr.mxu0 0.0
    %910 = vmatpush1.msra.mxu0 %v872
    %911 = vmatprep.subr.mxu0 0.0
    %912 = vmatpush1.msra.mxu0 %v873
    %913 = vmatprep.subr.mxu0 0.0
    %914 = vmatpush1.msra.mxu0 %v874
    %915 = vmatprep.subr.mxu0 0.0
    %916 = vmatpush1.msra.mxu0 0.0
    %917 = vmatprep.subr.mxu0 0.0
    %918 = vmatpush1.msra.mxu0 0.0
    %919 = vmatprep.subr.mxu0 0.0
    %920 = vmatpush1.msra.mxu0 0.0
    %921 = vmatprep.subr.mxu0 0.0
    %922 = vmatpush1.msra.mxu0 0.0
    %923 = vmatprep.subr.mxu0 0.0
    %924 = vmatpush1.msra.mxu0 0.0
    %925 = vmatprep.subr.mxu0 0.0
    %926 = vmatpush1.msra.mxu0 0.0
    %927 = vmatprep.subr.mxu0 0.0
    %928 = vmatpush1.msra.mxu0 0.0
    %929 = vmatprep.subr.mxu0 0.0
    %930 = vmatpush1.msra.mxu0 0.0
    %931 = vmatprep.subr.mxu0 0.0
    %932 = vmatpush1.msra.mxu0 0.0
    %933 = vmatprep.subr.mxu0 0.0
    %934 = vmatpush1.msra.mxu0 0.0
    %935 = vmatprep.subr.mxu0 0.0
    %936 = vmatpush1.msra.mxu0 0.0
    %937 = vmatprep.subr.mxu0 0.0
    %938 = vmatpush1.msra.mxu0 0.0
    %939 = vmatprep.subr.mxu0 0.0
    %940 = vmatpush1.msra.mxu0 0.0
    %941 = vmatprep.subr.mxu0 0.0
    %942 = vmatpush1.msra.mxu0 0.0
    %943 = vmatprep.subr.mxu0 0.0
    %944 = vmatpush1.msra.mxu0 0.0
    %945 = vmatprep.subr.mxu0 0.0
    %946 = vmatpush1.msra.mxu0 0.0
    %947 = vmatprep.mubr.f32.mxu0 0.0
    %948 = vmatmul.mubr.f32.gmra.mrb[0].mxu0 %v851
    %v949 = vpop.f32.mrb[0].mxu0
    %v950 = vadd.f32 %v881, %v949
    %v951 = vpop.f32.mrb[0].mxu0
    %952 = vmatprep.mubr.f32.mxu0 0.0
    %953 = vmatmul.mubr.f32.gmra.mrb[0].mxu0 %v852
    %v954 = vpop.f32.mrb[0].mxu0
    %v955 = vadd.f32 %v881, %v954
    %v956 = vpop.f32.mrb[0].mxu0
    %957 = vmatprep.mubr.f32.mxu0 0.0
    %958 = vmatmul.mubr.f32.gmra.mrb[0].mxu0 %v853
    %v959 = vpop.f32.mrb[0].mxu0
    %v960 = vadd.f32 %v881, %v959
    %v961 = vpop.f32.mrb[0].mxu0
    %962 = vmatprep.mubr.f32.mxu0 0.0
    %963 = vmatmul.mubr.f32.gmra.mrb[0].mxu0 %v854
    %v964 = vpop.f32.mrb[0].mxu0
    %v965 = vadd.f32 %v881, %v964
    %v966 = vpop.f32.mrb[0].mxu0
    %967 = vmatprep.mubr.f32.mxu0 0.0
    %968 = vmatmul.mubr.f32.gmra.mrb[0].mxu0 %v855
    %v969 = vpop.f32.mrb[0].mxu0
    %v970 = vadd.f32 %v881, %v969
    %v971 = vpop.f32.mrb[0].mxu0
    %972 = vmatprep.mubr.f32.mxu0 0.0
    %973 = vmatmul.mubr.f32.gmra.mrb[0].mxu0 %v856
    %v974 = vpop.f32.mrb[0].mxu0
    %v975 = vadd.f32 %v881, %v974
    %v976 = vpop.f32.mrb[0].mxu0
    %977 = vmatprep.mubr.f32.mxu0 0.0
    %978 = vmatmul.mubr.f32.gmra.mrb[0].mxu0 %v857
    %v979 = vpop.f32.mrb[0].mxu0
    %v980 = vadd.f32 %v881, %v979
    %v981 = vpop.f32.mrb[0].mxu0
    %982 = vmatprep.mubr.f32.mxu0 0.0
    %983 = vmatmul.mubr.f32.gmra.mrb[0].mxu0 %v858
    %v984 = vpop.f32.mrb[0].mxu0
    %v985 = vadd.f32 %v881, %v984
    %v986 = vpop.f32.mrb[0].mxu0
    %987 = vdwg.mxu0
    %988 = vst [vmem:[#allocation11] sm:$0xff] %v950
    %989 = vst [vmem:[#allocation11 + $0x8] sm:$0xff] %v955
    %990 = vst [vmem:[#allocation11 + $0x10] sm:$0xff] %v960
    %991 = vst [vmem:[#allocation11 + $0x18] sm:$0xff] %v965
    %992 = vst [vmem:[#allocation11 + $0x20] sm:$0xff] %v970
    %993 = vst [vmem:[#allocation11 + $0x28] sm:$0xff] %v975
    %994 = vst [vmem:[#allocation11 + $0x30] sm:$0xff] %v980
    %995 = vst [vmem:[#allocation11 + $0x38] sm:$0xff] %v985
    %s996 = scalar_lea.vmem [#allocation9], 128
    %v997 = vld [vmem:[%s996] sm:$0xff]
    %v998 = vld [vmem:[%s996 + $0x8] sm:$0xff]
    %v999 = vld [vmem:[%s996 + $0x10] sm:$0xff]
    %v1000 = vld [vmem:[%s996 + $0x18] sm:$0xff]
    %v1001 = vld [vmem:[%s996 + $0x20] sm:$0xff]
    %v1002 = vld [vmem:[%s996 + $0x28] sm:$0xff]
    %v1003 = vld [vmem:[%s996 + $0x30] sm:$0xff]
    %v1004 = vld [vmem:[%s996 + $0x38] sm:$0xff]
    %v1005 = vld [vmem:[%s996 + $0x40] sm:$0xff]
    %v1006 = vld [vmem:[%s996 + $0x48] sm:$0xff]
    %v1007 = vld [vmem:[%s996 + $0x50] sm:$0xff]
    %v1008 = vld [vmem:[%s996 + $0x58] sm:$0xff]
    %v1009 = vld [vmem:[%s996 + $0x60] sm:$0xff]
    %v1010 = vld [vmem:[%s996 + $0x68] sm:$0xff]
    %v1011 = vld [vmem:[%s996 + $0x70] sm:$0xff]
    %v1012 = vld [vmem:[%s996 + $0x78] sm:$0xff]
    %s1013 = scalar_lea.vmem [#allocation2], 8
    %v1014 = vld [vmem:[%s1013] sm:$0xff]
    %v1015 = vld [vmem:[#allocation11] sm:$0xff]
    %1016 = vmatprep.subr.mxu0 0.0
    %1017 = vmatpush1.msra.mxu0 %v997
    %1018 = vmatprep.subr.mxu0 0.0
    %1019 = vmatpush1.msra.mxu0 %v998
    %1020 = vmatprep.subr.mxu0 0.0
    %1021 = vmatpush1.msra.mxu0 %v999
    %1022 = vmatprep.subr.mxu0 0.0
    %1023 = vmatpush1.msra.mxu0 %v1000
    %1024 = vmatprep.subr.mxu0 0.0
    %1025 = vmatpush1.msra.mxu0 %v1001
    %1026 = vmatprep.subr.mxu0 0.0
    %1027 = vmatpush1.msra.mxu0 %v1002
    %1028 = vmatprep.subr.mxu0 0.0
    %1029 = vmatpush1.msra.mxu0 %v1003
    %1030 = vmatprep.subr.mxu0 0.0
    %1031 = vmatpush1.msra.mxu0 %v1004
    %1032 = vmatprep.subr.mxu0 0.0
    %1033 = vmatpush1.msra.mxu0 %v1005
    %1034 = vmatprep.subr.mxu0 0.0
    %1035 = vmatpush1.msra.mxu0 %v1006
    %1036 = vmatprep.subr.mxu0 0.0
    %1037 = vmatpush1.msra.mxu0 %v1007
    %1038 = vmatprep.subr.mxu0 0.0
    %1039 = vmatpush1.msra.mxu0 %v1008
    %1040 = vmatprep.subr.mxu0 0.0
    %1041 = vmatpush1.msra.mxu0 %v1009
    %1042 = vmatprep.subr.mxu0 0.0
    %1043 = vmatpush1.msra.mxu0 %v1010
    %1044 = vmatprep.subr.mxu0 0.0
    %1045 = vmatpush1.msra.mxu0 %v1011
    %1046 = vmatprep.subr.mxu0 0.0
    %1047 = vmatpush1.msra.mxu0 %v1012
    %1048 = vmatprep.subr.mxu0 0.0
    %1049 = vmatpush1.msra.mxu0 0.0
    %1050 = vmatprep.subr.mxu0 0.0
    %1051 = vmatpush1.msra.mxu0 0.0
    %1052 = vmatprep.subr.mxu0 0.0
    %1053 = vmatpush1.msra.mxu0 0.0
    %1054 = vmatprep.subr.mxu0 0.0
    %1055 = vmatpush1.msra.mxu0 0.0
    %1056 = vmatprep.subr.mxu0 0.0
    %1057 = vmatpush1.msra.mxu0 0.0
    %1058 = vmatprep.subr.mxu0 0.0
    %1059 = vmatpush1.msra.mxu0 0.0
    %1060 = vmatprep.subr.mxu0 0.0
    %1061 = vmatpush1.msra.mxu0 0.0
    %1062 = vmatprep.subr.mxu0 0.0
    %1063 = vmatpush1.msra.mxu0 0.0
    %1064 = vmatprep.subr.mxu0 0.0
    %1065 = vmatpush1.msra.mxu0 0.0
    %1066 = vmatprep.subr.mxu0 0.0
    %1067 = vmatpush1.msra.mxu0 0.0
    %1068 = vmatprep.subr.mxu0 0.0
    %1069 = vmatpush1.msra.mxu0 0.0
    %1070 = vmatprep.subr.mxu0 0.0
    %1071 = vmatpush1.msra.mxu0 0.0
    %1072 = vmatprep.subr.mxu0 0.0
    %1073 = vmatpush1.msra.mxu0 0.0
    %1074 = vmatprep.subr.mxu0 0.0
    %1075 = vmatpush1.msra.mxu0 0.0
    %1076 = vmatprep.subr.mxu0 0.0
    %1077 = vmatpush1.msra.mxu0 0.0
    %1078 = vmatprep.subr.mxu0 0.0
    %1079 = vmatpush1.msra.mxu0 0.0
    %1080 = vmatprep.mubr.f32.mxu0 0.0
    %1081 = vmatmul.mubr.f32.gmra.mrb[0].mxu0 %v1014
    %v1082 = vpop.f32.mrb[0].mxu0
    %v1083 = vadd.f32 0.0, %v1082
    %v1084 = vpop.f32.mrb[0].mxu0
    %1085 = vdwg.mxu0
    %v1086 = vadd.f32 %v1015, %v1083
    %v1087 = vtanh.pop %v1086
    %1088 = vst [vmem:[#allocation11] sm:$0xff] %v1087
    %v1089 = vld [vmem:[%s320] sm:$0xff]
    %1090 = vmatprep.subr.mxu0 0.0
    %1091 = vmatpush1.msra.mxu0 %v997
    %1092 = vmatprep.subr.mxu0 0.0
    %1093 = vmatpush1.msra.mxu0 %v998
    %1094 = vmatprep.subr.mxu0 0.0
    %1095 = vmatpush1.msra.mxu0 %v999
    %1096 = vmatprep.subr.mxu0 0.0
    %1097 = vmatpush1.msra.mxu0 %v1000
    %1098 = vmatprep.subr.mxu0 0.0
    %1099 = vmatpush1.msra.mxu0 %v1001
    %1100 = vmatprep.subr.mxu0 0.0
    %1101 = vmatpush1.msra.mxu0 %v1002
    %1102 = vmatprep.subr.mxu0 0.0
    %1103 = vmatpush1.msra.mxu0 %v1003
    %1104 = vmatprep.subr.mxu0 0.0
    %1105 = vmatpush1.msra.mxu0 %v1004
    %1106 = vmatprep.subr.mxu0 0.0
    %1107 = vmatpush1.msra.mxu0 %v1005
    %1108 = vmatprep.subr.mxu0 0.0
    %1109 = vmatpush1.msra.mxu0 %v1006
    %1110 = vmatprep.subr.mxu0 0.0
    %1111 = vmatpush1.msra.mxu0 %v1007
    %1112 = vmatprep.subr.mxu0 0.0
    %1113 = vmatpush1.msra.mxu0 %v1008
    %1114 = vmatprep.subr.mxu0 0.0
    %1115 = vmatpush1.msra.mxu0 %v1009
    %1116 = vmatprep.subr.mxu0 0.0
    %1117 = vmatpush1.msra.mxu0 %v1010
    %1118 = vmatprep.subr.mxu0 0.0
    %1119 = vmatpush1.msra.mxu0 %v1011
    %1120 = vmatprep.subr.mxu0 0.0
    %1121 = vmatpush1.msra.mxu0 %v1012
    %1122 = vmatprep.subr.mxu0 0.0
    %1123 = vmatpush1.msra.mxu0 0.0
    %1124 = vmatprep.subr.mxu0 0.0
    %1125 = vmatpush1.msra.mxu0 0.0
    %1126 = vmatprep.subr.mxu0 0.0
    %1127 = vmatpush1.msra.mxu0 0.0
    %1128 = vmatprep.subr.mxu0 0.0
    %1129 = vmatpush1.msra.mxu0 0.0
    %1130 = vmatprep.subr.mxu0 0.0
    %1131 = vmatpush1.msra.mxu0 0.0
    %1132 = vmatprep.subr.mxu0 0.0
    %1133 = vmatpush1.msra.mxu0 0.0
    %1134 = vmatprep.subr.mxu0 0.0
    %1135 = vmatpush1.msra.mxu0 0.0
    %1136 = vmatprep.subr.mxu0 0.0
    %1137 = vmatpush1.msra.mxu0 0.0
    %1138 = vmatprep.subr.mxu0 0.0
    %1139 = vmatpush1.msra.mxu0 0.0
    %1140 = vmatprep.subr.mxu0 0.0
    %1141 = vmatpush1.msra.mxu0 0.0
    %1142 = vmatprep.subr.mxu0 0.0
    %1143 = vmatpush1.msra.mxu0 0.0
    %1144 = vmatprep.subr.mxu0 0.0
    %1145 = vmatpush1.msra.mxu0 0.0
    %1146 = vmatprep.subr.mxu0 0.0
    %1147 = vmatpush1.msra.mxu0 0.0
    %1148 = vmatprep.subr.mxu0 0.0
    %1149 = vmatpush1.msra.mxu0 0.0
    %1150 = vmatprep.subr.mxu0 0.0
    %1151 = vmatpush1.msra.mxu0 0.0
    %1152 = vmatprep.subr.mxu0 0.0
    %1153 = vmatpush1.msra.mxu0 0.0
    %1154 = vmatprep.mubr.f32.mxu0 0.0
    %1155 = vmatmul.mubr.f32.gmra.mrb[0].mxu0 %v1087
    %v1156 = vpop.f32.mrb[0].mxu0
    %v1157 = vadd.f32 0.0, %v1156
    %v1158 = vpop.f32.mrb[0].mxu0
    %1159 = vdwg.mxu0
    %v1160 = vadd.f32 %v1089, %v1157
    %v1161 = vtanh.pop %v1160
    %1162 = vst [vmem:[%s320] sm:$0xff] %v1161
    %v1163 = vld [vmem:[%s395] sm:$0xff]
    %1164 = vmatprep.subr.mxu0 0.0
    %1165 = vmatpush1.msra.mxu0 %v997
    %1166 = vmatprep.subr.mxu0 0.0
    %1167 = vmatpush1.msra.mxu0 %v998
    %1168 = vmatprep.subr.mxu0 0.0
    %1169 = vmatpush1.msra.mxu0 %v999
    %1170 = vmatprep.subr.mxu0 0.0
    %1171 = vmatpush1.msra.mxu0 %v1000
    %1172 = vmatprep.subr.mxu0 0.0
    %1173 = vmatpush1.msra.mxu0 %v1001
    %1174 = vmatprep.subr.mxu0 0.0
    %1175 = vmatpush1.msra.mxu0 %v1002
    %1176 = vmatprep.subr.mxu0 0.0
    %1177 = vmatpush1.msra.mxu0 %v1003
    %1178 = vmatprep.subr.mxu0 0.0
    %1179 = vmatpush1.msra.mxu0 %v1004
    %1180 = vmatprep.subr.mxu0 0.0
    %1181 = vmatpush1.msra.mxu0 %v1005
    %1182 = vmatprep.subr.mxu0 0.0
    %1183 = vmatpush1.msra.mxu0 %v1006
    %1184 = vmatprep.subr.mxu0 0.0
    %1185 = vmatpush1.msra.mxu0 %v1007
    %1186 = vmatprep.subr.mxu0 0.0
    %1187 = vmatpush1.msra.mxu0 %v1008
    %1188 = vmatprep.subr.mxu0 0.0
    %1189 = vmatpush1.msra.mxu0 %v1009
    %1190 = vmatprep.subr.mxu0 0.0
    %1191 = vmatpush1.msra.mxu0 %v1010
    %1192 = vmatprep.subr.mxu0 0.0
    %1193 = vmatpush1.msra.mxu0 %v1011
    %1194 = vmatprep.subr.mxu0 0.0
    %1195 = vmatpush1.msra.mxu0 %v1012
    %1196 = vmatprep.subr.mxu0 0.0
    %1197 = vmatpush1.msra.mxu0 0.0
    %1198 = vmatprep.subr.mxu0 0.0
    %1199 = vmatpush1.msra.mxu0 0.0
    %1200 = vmatprep.subr.mxu0 0.0
    %1201 = vmatpush1.msra.mxu0 0.0
    %1202 = vmatprep.subr.mxu0 0.0
    %1203 = vmatpush1.msra.mxu0 0.0
    %1204 = vmatprep.subr.mxu0 0.0
    %1205 = vmatpush1.msra.mxu0 0.0
    %1206 = vmatprep.subr.mxu0 0.0
    %1207 = vmatpush1.msra.mxu0 0.0
    %1208 = vmatprep.subr.mxu0 0.0
    %1209 = vmatpush1.msra.mxu0 0.0
    %1210 = vmatprep.subr.mxu0 0.0
    %1211 = vmatpush1.msra.mxu0 0.0
    %1212 = vmatprep.subr.mxu0 0.0
    %1213 = vmatpush1.msra.mxu0 0.0
    %1214 = vmatprep.subr.mxu0 0.0
    %1215 = vmatpush1.msra.mxu0 0.0
    %1216 = vmatprep.subr.mxu0 0.0
    %1217 = vmatpush1.msra.mxu0 0.0
    %1218 = vmatprep.subr.mxu0 0.0
    %1219 = vmatpush1.msra.mxu0 0.0
    %1220 = vmatprep.subr.mxu0 0.0
    %1221 = vmatpush1.msra.mxu0 0.0
    %1222 = vmatprep.subr.mxu0 0.0
    %1223 = vmatpush1.msra.mxu0 0.0
    %1224 = vmatprep.subr.mxu0 0.0
    %1225 = vmatpush1.msra.mxu0 0.0
    %1226 = vmatprep.subr.mxu0 0.0
    %1227 = vmatpush1.msra.mxu0 0.0
    %1228 = vmatprep.mubr.f32.mxu0 0.0
    %1229 = vmatmul.mubr.f32.gmra.mrb[0].mxu0 %v1161
    %v1230 = vpop.f32.mrb[0].mxu0
    %v1231 = vadd.f32 0.0, %v1230
    %v1232 = vpop.f32.mrb[0].mxu0
    %1233 = vdwg.mxu0
    %v1234 = vadd.f32 %v1163, %v1231
    %v1235 = vtanh.pop %v1234
    %1236 = vst [vmem:[%s395] sm:$0xff] %v1235
    %v1237 = vld [vmem:[%s470] sm:$0xff]
    %1238 = vmatprep.subr.mxu0 0.0
    %1239 = vmatpush1.msra.mxu0 %v997
    %1240 = vmatprep.subr.mxu0 0.0
    %1241 = vmatpush1.msra.mxu0 %v998
    %1242 = vmatprep.subr.mxu0 0.0
    %1243 = vmatpush1.msra.mxu0 %v999
    %1244 = vmatprep.subr.mxu0 0.0
    %1245 = vmatpush1.msra.mxu0 %v1000
    %1246 = vmatprep.subr.mxu0 0.0
    %1247 = vmatpush1.msra.mxu0 %v1001
    %1248 = vmatprep.subr.mxu0 0.0
    %1249 = vmatpush1.msra.mxu0 %v1002
    %1250 = vmatprep.subr.mxu0 0.0
    %1251 = vmatpush1.msra.mxu0 %v1003
    %1252 = vmatprep.subr.mxu0 0.0
    %1253 = vmatpush1.msra.mxu0 %v1004
    %1254 = vmatprep.subr.mxu0 0.0
    %1255 = vmatpush1.msra.mxu0 %v1005
    %1256 = vmatprep.subr.mxu0 0.0
    %1257 = vmatpush1.msra.mxu0 %v1006
    %1258 = vmatprep.subr.mxu0 0.0
    %1259 = vmatpush1.msra.mxu0 %v1007
    %1260 = vmatprep.subr.mxu0 0.0
    %1261 = vmatpush1.msra.mxu0 %v1008
    %1262 = vmatprep.subr.mxu0 0.0
    %1263 = vmatpush1.msra.mxu0 %v1009
    %1264 = vmatprep.subr.mxu0 0.0
    %1265 = vmatpush1.msra.mxu0 %v1010
    %1266 = vmatprep.subr.mxu0 0.0
    %1267 = vmatpush1.msra.mxu0 %v1011
    %1268 = vmatprep.subr.mxu0 0.0
    %1269 = vmatpush1.msra.mxu0 %v1012
    %1270 = vmatprep.subr.mxu0 0.0
    %1271 = vmatpush1.msra.mxu0 0.0
    %1272 = vmatprep.subr.mxu0 0.0
    %1273 = vmatpush1.msra.mxu0 0.0
    %1274 = vmatprep.subr.mxu0 0.0
    %1275 = vmatpush1.msra.mxu0 0.0
    %1276 = vmatprep.subr.mxu0 0.0
    %1277 = vmatpush1.msra.mxu0 0.0
    %1278 = vmatprep.subr.mxu0 0.0
    %1279 = vmatpush1.msra.mxu0 0.0
    %1280 = vmatprep.subr.mxu0 0.0
    %1281 = vmatpush1.msra.mxu0 0.0
    %1282 = vmatprep.subr.mxu0 0.0
    %1283 = vmatpush1.msra.mxu0 0.0
    %1284 = vmatprep.subr.mxu0 0.0
    %1285 = vmatpush1.msra.mxu0 0.0
    %1286 = vmatprep.subr.mxu0 0.0
    %1287 = vmatpush1.msra.mxu0 0.0
    %1288 = vmatprep.subr.mxu0 0.0
    %1289 = vmatpush1.msra.mxu0 0.0
    %1290 = vmatprep.subr.mxu0 0.0
    %1291 = vmatpush1.msra.mxu0 0.0
    %1292 = vmatprep.subr.mxu0 0.0
    %1293 = vmatpush1.msra.mxu0 0.0
    %1294 = vmatprep.subr.mxu0 0.0
    %1295 = vmatpush1.msra.mxu0 0.0
    %1296 = vmatprep.subr.mxu0 0.0
    %1297 = vmatpush1.msra.mxu0 0.0
    %1298 = vmatprep.subr.mxu0 0.0
    %1299 = vmatpush1.msra.mxu0 0.0
    %1300 = vmatprep.subr.mxu0 0.0
    %1301 = vmatpush1.msra.mxu0 0.0
    %1302 = vmatprep.mubr.f32.mxu0 0.0
    %1303 = vmatmul.mubr.f32.gmra.mrb[0].mxu0 %v1235
    %v1304 = vpop.f32.mrb[0].mxu0
    %v1305 = vadd.f32 0.0, %v1304
    %v1306 = vpop.f32.mrb[0].mxu0
    %1307 = vdwg.mxu0
    %v1308 = vadd.f32 %v1237, %v1305
    %v1309 = vtanh.pop %v1308
    %1310 = vst [vmem:[%s470] sm:$0xff] %v1309
    %v1311 = vld [vmem:[%s545] sm:$0xff]
    %1312 = vmatprep.subr.mxu0 0.0
    %1313 = vmatpush1.msra.mxu0 %v997
    %1314 = vmatprep.subr.mxu0 0.0
    %1315 = vmatpush1.msra.mxu0 %v998
    %1316 = vmatprep.subr.mxu0 0.0
    %1317 = vmatpush1.msra.mxu0 %v999
    %1318 = vmatprep.subr.mxu0 0.0
    %1319 = vmatpush1.msra.mxu0 %v1000
    %1320 = vmatprep.subr.mxu0 0.0
    %1321 = vmatpush1.msra.mxu0 %v1001
    %1322 = vmatprep.subr.mxu0 0.0
    %1323 = vmatpush1.msra.mxu0 %v1002
    %1324 = vmatprep.subr.mxu0 0.0
    %1325 = vmatpush1.msra.mxu0 %v1003
    %1326 = vmatprep.subr.mxu0 0.0
    %1327 = vmatpush1.msra.mxu0 %v1004
    %1328 = vmatprep.subr.mxu0 0.0
    %1329 = vmatpush1.msra.mxu0 %v1005
    %1330 = vmatprep.subr.mxu0 0.0
    %1331 = vmatpush1.msra.mxu0 %v1006
    %1332 = vmatprep.subr.mxu0 0.0
    %1333 = vmatpush1.msra.mxu0 %v1007
    %1334 = vmatprep.subr.mxu0 0.0
    %1335 = vmatpush1.msra.mxu0 %v1008
    %1336 = vmatprep.subr.mxu0 0.0
    %1337 = vmatpush1.msra.mxu0 %v1009
    %1338 = vmatprep.subr.mxu0 0.0
    %1339 = vmatpush1.msra.mxu0 %v1010
    %1340 = vmatprep.subr.mxu0 0.0
    %1341 = vmatpush1.msra.mxu0 %v1011
    %1342 = vmatprep.subr.mxu0 0.0
    %1343 = vmatpush1.msra.mxu0 %v1012
    %1344 = vmatprep.subr.mxu0 0.0
    %1345 = vmatpush1.msra.mxu0 0.0
    %1346 = vmatprep.subr.mxu0 0.0
    %1347 = vmatpush1.msra.mxu0 0.0
    %1348 = vmatprep.subr.mxu0 0.0
    %1349 = vmatpush1.msra.mxu0 0.0
    %1350 = vmatprep.subr.mxu0 0.0
    %1351 = vmatpush1.msra.mxu0 0.0
    %1352 = vmatprep.subr.mxu0 0.0
    %1353 = vmatpush1.msra.mxu0 0.0
    %1354 = vmatprep.subr.mxu0 0.0
    %1355 = vmatpush1.msra.mxu0 0.0
    %1356 = vmatprep.subr.mxu0 0.0
    %1357 = vmatpush1.msra.mxu0 0.0
    %1358 = vmatprep.subr.mxu0 0.0
    %1359 = vmatpush1.msra.mxu0 0.0
    %1360 = vmatprep.subr.mxu0 0.0
    %1361 = vmatpush1.msra.mxu0 0.0
    %1362 = vmatprep.subr.mxu0 0.0
    %1363 = vmatpush1.msra.mxu0 0.0
    %1364 = vmatprep.subr.mxu0 0.0
    %1365 = vmatpush1.msra.mxu0 0.0
    %1366 = vmatprep.subr.mxu0 0.0
    %1367 = vmatpush1.msra.mxu0 0.0
    %1368 = vmatprep.subr.mxu0 0.0
    %1369 = vmatpush1.msra.mxu0 0.0
    %1370 = vmatprep.subr.mxu0 0.0
    %1371 = vmatpush1.msra.mxu0 0.0
    %1372 = vmatprep.subr.mxu0 0.0
    %1373 = vmatpush1.msra.mxu0 0.0
    %1374 = vmatprep.subr.mxu0 0.0
    %1375 = vmatpush1.msra.mxu0 0.0
    %1376 = vmatprep.mubr.f32.mxu0 0.0
    %1377 = vmatmul.mubr.f32.gmra.mrb[0].mxu0 %v1309
    %v1378 = vpop.f32.mrb[0].mxu0
    %v1379 = vadd.f32 0.0, %v1378
    %v1380 = vpop.f32.mrb[0].mxu0
    %1381 = vdwg.mxu0
    %v1382 = vadd.f32 %v1311, %v1379
    %v1383 = vtanh.pop %v1382
    %1384 = vst [vmem:[%s545] sm:$0xff] %v1383
    %v1385 = vld [vmem:[%s620] sm:$0xff]
    %1386 = vmatprep.subr.mxu0 0.0
    %1387 = vmatpush1.msra.mxu0 %v997
    %1388 = vmatprep.subr.mxu0 0.0
    %1389 = vmatpush1.msra.mxu0 %v998
    %1390 = vmatprep.subr.mxu0 0.0
    %1391 = vmatpush1.msra.mxu0 %v999
    %1392 = vmatprep.subr.mxu0 0.0
    %1393 = vmatpush1.msra.mxu0 %v1000
    %1394 = vmatprep.subr.mxu0 0.0
    %1395 = vmatpush1.msra.mxu0 %v1001
    %1396 = vmatprep.subr.mxu0 0.0
    %1397 = vmatpush1.msra.mxu0 %v1002
    %1398 = vmatprep.subr.mxu0 0.0
    %1399 = vmatpush1.msra.mxu0 %v1003
    %1400 = vmatprep.subr.mxu0 0.0
    %1401 = vmatpush1.msra.mxu0 %v1004
    %1402 = vmatprep.subr.mxu0 0.0
    %1403 = vmatpush1.msra.mxu0 %v1005
    %1404 = vmatprep.subr.mxu0 0.0
    %1405 = vmatpush1.msra.mxu0 %v1006
    %1406 = vmatprep.subr.mxu0 0.0
    %1407 = vmatpush1.msra.mxu0 %v1007
    %1408 = vmatprep.subr.mxu0 0.0
    %1409 = vmatpush1.msra.mxu0 %v1008
    %1410 = vmatprep.subr.mxu0 0.0
    %1411 = vmatpush1.msra.mxu0 %v1009
    %1412 = vmatprep.subr.mxu0 0.0
    %1413 = vmatpush1.msra.mxu0 %v1010
    %1414 = vmatprep.subr.mxu0 0.0
    %1415 = vmatpush1.msra.mxu0 %v1011
    %1416 = vmatprep.subr.mxu0 0.0
    %1417 = vmatpush1.msra.mxu0 %v1012
    %1418 = vmatprep.subr.mxu0 0.0
    %1419 = vmatpush1.msra.mxu0 0.0
    %1420 = vmatprep.subr.mxu0 0.0
    %1421 = vmatpush1.msra.mxu0 0.0
    %1422 = vmatprep.subr.mxu0 0.0
    %1423 = vmatpush1.msra.mxu0 0.0
    %1424 = vmatprep.subr.mxu0 0.0
    %1425 = vmatpush1.msra.mxu0 0.0
    %1426 = vmatprep.subr.mxu0 0.0
    %1427 = vmatpush1.msra.mxu0 0.0
    %1428 = vmatprep.subr.mxu0 0.0
    %1429 = vmatpush1.msra.mxu0 0.0
    %1430 = vmatprep.subr.mxu0 0.0
    %1431 = vmatpush1.msra.mxu0 0.0
    %1432 = vmatprep.subr.mxu0 0.0
    %1433 = vmatpush1.msra.mxu0 0.0
    %1434 = vmatprep.subr.mxu0 0.0
    %1435 = vmatpush1.msra.mxu0 0.0
    %1436 = vmatprep.subr.mxu0 0.0
    %1437 = vmatpush1.msra.mxu0 0.0
    %1438 = vmatprep.subr.mxu0 0.0
    %1439 = vmatpush1.msra.mxu0 0.0
    %1440 = vmatprep.subr.mxu0 0.0
    %1441 = vmatpush1.msra.mxu0 0.0
    %1442 = vmatprep.subr.mxu0 0.0
    %1443 = vmatpush1.msra.mxu0 0.0
    %1444 = vmatprep.subr.mxu0 0.0
    %1445 = vmatpush1.msra.mxu0 0.0
    %1446 = vmatprep.subr.mxu0 0.0
    %1447 = vmatpush1.msra.mxu0 0.0
    %1448 = vmatprep.subr.mxu0 0.0
    %1449 = vmatpush1.msra.mxu0 0.0
    %1450 = vmatprep.mubr.f32.mxu0 0.0
    %1451 = vmatmul.mubr.f32.gmra.mrb[0].mxu0 %v1383
    %v1452 = vpop.f32.mrb[0].mxu0
    %v1453 = vadd.f32 0.0, %v1452
    %v1454 = vpop.f32.mrb[0].mxu0
    %1455 = vdwg.mxu0
    %v1456 = vadd.f32 %v1385, %v1453
    %v1457 = vtanh.pop %v1456
    %1458 = vst [vmem:[%s620] sm:$0xff] %v1457
    %v1459 = vld [vmem:[%s695] sm:$0xff]
    %1460 = vmatprep.subr.mxu0 0.0
    %1461 = vmatpush1.msra.mxu0 %v997
    %1462 = vmatprep.subr.mxu0 0.0
    %1463 = vmatpush1.msra.mxu0 %v998
    %1464 = vmatprep.subr.mxu0 0.0
    %1465 = vmatpush1.msra.mxu0 %v999
    %1466 = vmatprep.subr.mxu0 0.0
    %1467 = vmatpush1.msra.mxu0 %v1000
    %1468 = vmatprep.subr.mxu0 0.0
    %1469 = vmatpush1.msra.mxu0 %v1001
    %1470 = vmatprep.subr.mxu0 0.0
    %1471 = vmatpush1.msra.mxu0 %v1002
    %1472 = vmatprep.subr.mxu0 0.0
    %1473 = vmatpush1.msra.mxu0 %v1003
    %1474 = vmatprep.subr.mxu0 0.0
    %1475 = vmatpush1.msra.mxu0 %v1004
    %1476 = vmatprep.subr.mxu0 0.0
    %1477 = vmatpush1.msra.mxu0 %v1005
    %1478 = vmatprep.subr.mxu0 0.0
    %1479 = vmatpush1.msra.mxu0 %v1006
    %1480 = vmatprep.subr.mxu0 0.0
    %1481 = vmatpush1.msra.mxu0 %v1007
    %1482 = vmatprep.subr.mxu0 0.0
    %1483 = vmatpush1.msra.mxu0 %v1008
    %1484 = vmatprep.subr.mxu0 0.0
    %1485 = vmatpush1.msra.mxu0 %v1009
    %1486 = vmatprep.subr.mxu0 0.0
    %1487 = vmatpush1.msra.mxu0 %v1010
    %1488 = vmatprep.subr.mxu0 0.0
    %1489 = vmatpush1.msra.mxu0 %v1011
    %1490 = vmatprep.subr.mxu0 0.0
    %1491 = vmatpush1.msra.mxu0 %v1012
    %1492 = vmatprep.subr.mxu0 0.0
    %1493 = vmatpush1.msra.mxu0 0.0
    %1494 = vmatprep.subr.mxu0 0.0
    %1495 = vmatpush1.msra.mxu0 0.0
    %1496 = vmatprep.subr.mxu0 0.0
    %1497 = vmatpush1.msra.mxu0 0.0
    %1498 = vmatprep.subr.mxu0 0.0
    %1499 = vmatpush1.msra.mxu0 0.0
    %1500 = vmatprep.subr.mxu0 0.0
    %1501 = vmatpush1.msra.mxu0 0.0
    %1502 = vmatprep.subr.mxu0 0.0
    %1503 = vmatpush1.msra.mxu0 0.0
    %1504 = vmatprep.subr.mxu0 0.0
    %1505 = vmatpush1.msra.mxu0 0.0
    %1506 = vmatprep.subr.mxu0 0.0
    %1507 = vmatpush1.msra.mxu0 0.0
    %1508 = vmatprep.subr.mxu0 0.0
    %1509 = vmatpush1.msra.mxu0 0.0
    %1510 = vmatprep.subr.mxu0 0.0
    %1511 = vmatpush1.msra.mxu0 0.0
    %1512 = vmatprep.subr.mxu0 0.0
    %1513 = vmatpush1.msra.mxu0 0.0
    %1514 = vmatprep.subr.mxu0 0.0
    %1515 = vmatpush1.msra.mxu0 0.0
    %1516 = vmatprep.subr.mxu0 0.0
    %1517 = vmatpush1.msra.mxu0 0.0
    %1518 = vmatprep.subr.mxu0 0.0
    %1519 = vmatpush1.msra.mxu0 0.0
    %1520 = vmatprep.subr.mxu0 0.0
    %1521 = vmatpush1.msra.mxu0 0.0
    %1522 = vmatprep.subr.mxu0 0.0
    %1523 = vmatpush1.msra.mxu0 0.0
    %1524 = vmatprep.mubr.f32.mxu0 0.0
    %1525 = vmatmul.mubr.f32.gmra.mrb[0].mxu0 %v1457
    %v1526 = vpop.f32.mrb[0].mxu0
    %v1527 = vadd.f32 0.0, %v1526
    %v1528 = vpop.f32.mrb[0].mxu0
    %1529 = vdwg.mxu0
    %v1530 = vadd.f32 %v1459, %v1527
    %v1531 = vtanh.pop %v1530
    %1532 = vst [vmem:[%s695] sm:$0xff] %v1531
    %v1533 = vld [vmem:[%s770] sm:$0xff]
    %1534 = vmatprep.subr.mxu0 0.0
    %1535 = vmatpush1.msra.mxu0 %v997
    %1536 = vmatprep.subr.mxu0 0.0
    %1537 = vmatpush1.msra.mxu0 %v998
    %1538 = vmatprep.subr.mxu0 0.0
    %1539 = vmatpush1.msra.mxu0 %v999
    %1540 = vmatprep.subr.mxu0 0.0
    %1541 = vmatpush1.msra.mxu0 %v1000
    %1542 = vmatprep.subr.mxu0 0.0
    %1543 = vmatpush1.msra.mxu0 %v1001
    %1544 = vmatprep.subr.mxu0 0.0
    %1545 = vmatpush1.msra.mxu0 %v1002
    %1546 = vmatprep.subr.mxu0 0.0
    %1547 = vmatpush1.msra.mxu0 %v1003
    %1548 = vmatprep.subr.mxu0 0.0
    %1549 = vmatpush1.msra.mxu0 %v1004
    %1550 = vmatprep.subr.mxu0 0.0
    %1551 = vmatpush1.msra.mxu0 %v1005
    %1552 = vmatprep.subr.mxu0 0.0
    %1553 = vmatpush1.msra.mxu0 %v1006
    %1554 = vmatprep.subr.mxu0 0.0
    %1555 = vmatpush1.msra.mxu0 %v1007
    %1556 = vmatprep.subr.mxu0 0.0
    %1557 = vmatpush1.msra.mxu0 %v1008
    %1558 = vmatprep.subr.mxu0 0.0
    %1559 = vmatpush1.msra.mxu0 %v1009
    %1560 = vmatprep.subr.mxu0 0.0
    %1561 = vmatpush1.msra.mxu0 %v1010
    %1562 = vmatprep.subr.mxu0 0.0
    %1563 = vmatpush1.msra.mxu0 %v1011
    %1564 = vmatprep.subr.mxu0 0.0
    %1565 = vmatpush1.msra.mxu0 %v1012
    %1566 = vmatprep.subr.mxu0 0.0
    %1567 = vmatpush1.msra.mxu0 0.0
    %1568 = vmatprep.subr.mxu0 0.0
    %1569 = vmatpush1.msra.mxu0 0.0
    %1570 = vmatprep.subr.mxu0 0.0
    %1571 = vmatpush1.msra.mxu0 0.0
    %1572 = vmatprep.subr.mxu0 0.0
    %1573 = vmatpush1.msra.mxu0 0.0
    %1574 = vmatprep.subr.mxu0 0.0
    %1575 = vmatpush1.msra.mxu0 0.0
    %1576 = vmatprep.subr.mxu0 0.0
    %1577 = vmatpush1.msra.mxu0 0.0
    %1578 = vmatprep.subr.mxu0 0.0
    %1579 = vmatpush1.msra.mxu0 0.0
    %1580 = vmatprep.subr.mxu0 0.0
    %1581 = vmatpush1.msra.mxu0 0.0
    %1582 = vmatprep.subr.mxu0 0.0
    %1583 = vmatpush1.msra.mxu0 0.0
    %1584 = vmatprep.subr.mxu0 0.0
    %1585 = vmatpush1.msra.mxu0 0.0
    %1586 = vmatprep.subr.mxu0 0.0
    %1587 = vmatpush1.msra.mxu0 0.0
    %1588 = vmatprep.subr.mxu0 0.0
    %1589 = vmatpush1.msra.mxu0 0.0
    %1590 = vmatprep.subr.mxu0 0.0
    %1591 = vmatpush1.msra.mxu0 0.0
    %1592 = vmatprep.subr.mxu0 0.0
    %1593 = vmatpush1.msra.mxu0 0.0
    %1594 = vmatprep.subr.mxu0 0.0
    %1595 = vmatpush1.msra.mxu0 0.0
    %1596 = vmatprep.subr.mxu0 0.0
    %1597 = vmatpush1.msra.mxu0 0.0
    %1598 = vmatprep.mubr.f32.mxu0 0.0
    %1599 = vmatmul.mubr.f32.gmra.mrb[0].mxu0 %v1531
    %v1600 = vpop.f32.mrb[0].mxu0
    %v1601 = vadd.f32 0.0, %v1600
    %v1602 = vpop.f32.mrb[0].mxu0
    %1603 = vdwg.mxu0
    %v1604 = vadd.f32 %v1533, %v1601
    %v1605 = vtanh.pop %v1604
    %1606 = vst [vmem:[%s770] sm:$0xff] %v1605
    %1607 = vst [vmem:[%s1013] sm:$0xff] %v1605
    // Predicated region
    $region46: #{tpu_custom_call.1} parent=1 // pred_check
      %p1608 = pneg %p79
    $region47: #{tpu_custom_call.1} parent=1 // pred_check_branch
      %1610 = sbr.rel (%p1608) target = $region49
    $region48: #{tpu_custom_call.1} parent=1 // pred_region
      %v1611 = vld [vmem:[%s770] sm:$0xff]
      %s1612 = scalar_lea.vmem [#allocation12], 8
      %1613 = vst [vmem:[%s1612] sm:$0xff] %v1611
    $region49: #{tpu_custom_call.1} parent=1 // pred_fallthru
      _
    // Predicated region
    $region50: #{tpu_custom_call.1} parent=1 // pred_check
      _
    $region51: #{tpu_custom_call.1} parent=1 // pred_check_branch
      %1615 = sbr.rel (0) target = $region53
    $region52: #{tpu_custom_call.1} parent=1 // pred_region
      %s1617 = ssub.s32 1024, 1024
      %1618 = vsyncadd [#allocation5], %s1617
      %s1619 = sshll.u32 [#allocation11], 4
      %s1620 = int_to_ptr.vmem [resolvable:$true] %s1619
      %1625 = dma.vmem_to_hbm [thread:$0]  %s1620, 1024, %s5, [#allocation5], 128, 128, 8
    $region53: #{tpu_custom_call.1} parent=1 // pred_fallthru
      _
    // Predicated region
    $region54: #{tpu_custom_call.1} parent=1 // pred_check
      _
    $region55: #{tpu_custom_call.1} parent=1 // pred_check_branch
      %1627 = sbr.rel (0) target = $region57
    $region56: #{tpu_custom_call.1} parent=1 // pred_region
      %s1629 = ssub.s32 256, 256
      %1630 = vsyncadd [#allocation13], %s1629
      %s1631 = sshll.u32 [#allocation12], 4
      %s1632 = int_to_ptr.vmem [resolvable:$true] %s1631
      %1637 = dma.vmem_to_hbm [thread:$0]  %s1632, 256, %s6, [#allocation13], 128, 128, 8
    $region57: #{tpu_custom_call.1} parent=1 // pred_fallthru
      _
    // Predicated region
    $region58: #{tpu_custom_call.1} parent=1 // pred_check
      _
    $region59: #{tpu_custom_call.1} parent=1 // pred_check_branch
      %1639 = sbr.rel (0) target = $region61
    $region60: #{tpu_custom_call.1} parent=1 // pred_region
      %1640 = dma.done [#allocation5], 1024
    $region61: #{tpu_custom_call.1} parent=1 // pred_fallthru
      _
    // Predicated region
    $region62: #{tpu_custom_call.1} parent=1 // pred_check
      _
    $region63: #{tpu_custom_call.1} parent=1 // pred_check_branch
      %1642 = sbr.rel (0) target = $region65
    $region64: #{tpu_custom_call.1} parent=1 // pred_region
      %1643 = dma.done [#allocation13], 256
    $region65: #{tpu_custom_call.1} parent=1 // pred_fallthru
      _
    %1644 = vsyncpa [#allocation4], 1
    %1645 = vsyncpa [#allocation7], 1
    %1646 = vsyncpa [#allocation10], 1
    %1647 = vsyncpa [#allocation5], 1
    %1648 = vsyncpa [#allocation13], 1

</llo_original>
